<compile_context>
chip_gen: v5e
topology: v5e:2x2
jax: 0.10.0
libtpu: 0.0.40
codegen_flags: <defaults>
</compile_context>

<pallas_src>
import functools

import jax
import jax.numpy as jnp
from jax.experimental import pallas as pl
from jax.experimental.pallas import tpu as pltpu


def _conv_bn_relu_kernel(x_ref, w_ref, b_ref, o_ref, *, kh, kw, apply_relu):
    """Fused stride-1 'same' conv + folded-BN scale/shift + optional ReLU.

    x_ref: (1, Hout+kh-1, Wout+kw-1, Cin)  spatially padded NHWC input block
    w_ref: (kh*kw, Cin, Cout)              BN-scale-folded weights (one slab per tap)
    b_ref: (1, Cout)                       folded BN shift (zeros if BN disabled)
    o_ref: (1, Hout, Wout, Cout)
    """
    _, hout, wout, cout = o_ref.shape
    cin = w_ref.shape[1]

    acc = jnp.zeros((hout * wout, cout), dtype=jnp.float32)

    # Direct conv: one (Hout*Wout, Cin) x (Cin, Cout) MXU matmul per kernel tap.
    for i in range(kh):
        for j in range(kw):
            patch = x_ref[0, i:i + hout, j:j + wout, :].astype(jnp.float32)
            patch = patch.reshape(hout * wout, cin)
            acc += jnp.dot(patch,
                           w_ref[i * kw + j].astype(jnp.float32),
                           preferred_element_type=jnp.float32)

    acc += b_ref[...].astype(jnp.float32)      # (1, Cout) broadcast: folded BN shift
    if apply_relu:                             # activation fused into the epilogue
        acc = jnp.maximum(acc, 0.0)
    o_ref[0] = acc.reshape(hout, wout, cout).astype(o_ref.dtype)


@functools.partial(jax.jit, static_argnames=("use_activation",))
def conv_bn_relu(x_nchw, weight_oihw, *, use_activation=False, bn=None, eps=1e-5):
    """PyTorch ConvBNReLU forward: Conv2d(stride=1, padding=k//2, bias=False)
    -> optional BatchNorm2d (inference, folded) -> optional ReLU.

    x_nchw:      (N, Cin, H, W)
    weight_oihw: (Cout, Cin, KH, KW)
    bn:          optional dict(gamma, beta, mean, var), each (Cout,)
    """
    n, cin, h, w = x_nchw.shape
    cout, cin_w, kh, kw = weight_oihw.shape
    assert cin == cin_w
    ph, pw = kh // 2, kw // 2
    out_dtype = x_nchw.dtype

    # ---- trace-time BN folding into conv weights + bias ------------------
    if bn is not None:
        inv_std = bn["gamma"] / jnp.sqrt(bn["var"] + eps)            # (Cout,)
        shift = bn["beta"] - bn["mean"] * inv_std                    # (Cout,)
    else:
        inv_std = jnp.ones((cout,), jnp.float32)
        shift = jnp.zeros((cout,), jnp.float32)

    # (Cout, Cin, KH, KW) -> (KH*KW, Cin, Cout), scaled per output channel.
    w_taps = jnp.transpose(weight_oihw, (2, 3, 1, 0)).reshape(kh * kw, cin, cout)
    w_taps = (w_taps.astype(jnp.float32) * inv_std[None, None, :]).astype(jnp.float32)
    bias = shift.reshape(1, cout).astype(jnp.float32)

    # NCHW -> NHWC (channel = lane/contraction dim) + conv halo padding.
    # A production pipeline would keep NHWC end-to-end and skip these layout ops.
    x_nhwc = jnp.transpose(x_nchw, (0, 2, 3, 1))
    x_pad = jnp.pad(x_nhwc, ((0, 0), (ph, ph), (pw, pw), (0, 0)))

    hp, wp = h + 2 * ph, w + 2 * pw
    hout, wout = hp - kh + 1, wp - kw + 1

    kernel = functools.partial(_conv_bn_relu_kernel, kh=kh, kw=kw,
                               apply_relu=use_activation)

    out_nhwc = pl.pallas_call(
        kernel,
        out_shape=jax.ShapeDtypeStruct((n, hout, wout, cout), out_dtype),
        grid_spec=pltpu.PrefetchScalarGridSpec(
            num_scalar_prefetch=0,
            grid=(n,),  # one image per grid step (small demo shapes)
            in_specs=[
                pl.BlockSpec((1, hp, wp, cin), lambda i: (i, 0, 0, 0)),
                pl.BlockSpec((kh * kw, cin, cout), lambda i: (0, 0, 0)),
                pl.BlockSpec((1, cout), lambda i: (0, 0)),
            ],
            out_specs=pl.BlockSpec((1, hout, wout, cout), lambda i: (i, 0, 0, 0)),
        ),
        compiler_params=pltpu.CompilerParams(
            # On v7x, use pltpu.CORE_PARALLEL here to shard the batch axis
            # across both TensorCores.
            dimension_semantics=("parallel",),
        ),
    )(x_pad, w_taps, bias)

    # Back to PyTorch's NCHW layout.
    return jnp.transpose(out_nhwc, (0, 3, 1, 2))


if __name__ == "__main__":
    key = jax.random.PRNGKey(0)
    kx, kwt, kg, kb, km, kv = jax.random.split(key, 6)

    N, Cin, H, W = 2, 4, 16, 16
    Cout, K = 8, 3

    x = jax.random.normal(kx, (N, Cin, H, W), dtype=jnp.float32)
    weight = jax.random.normal(kwt, (Cout, Cin, K, K), dtype=jnp.float32) * 0.1
    bn = dict(
        gamma=1.0 + 0.1 * jax.random.normal(kg, (Cout,), jnp.float32),
        beta=0.1 * jax.random.normal(kb, (Cout,), jnp.float32),
        mean=0.1 * jax.random.normal(km, (Cout,), jnp.float32),
        var=jax.nn.softplus(jax.random.normal(kv, (Cout,), jnp.float32)) + 0.5,
    )

    # Fused Conv + folded-BN + ReLU (use_batch_norm=True, use_activation=True).
    y_full = conv_bn_relu(x, weight, use_activation=True, bn=bn)
    jax.block_until_ready(y_full)

    # Plain conv (module defaults: use_batch_norm=False, use_activation=False).
    y_plain = conv_bn_relu(x, weight, use_activation=False, bn=None)
    jax.block_until_ready(y_plain)

    # ---------------- plain-JAX reference ----------------
    def ref(xi, wi, bn_p, use_relu):
        out = jax.lax.conv_general_dilated(
            xi, wi, window_strides=(1, 1),
            padding=((K // 2, K // 2), (K // 2, K // 2)),
            dimension_numbers=("NCHW", "OIHW", "NCHW"),
            precision=jax.lax.Precision.HIGHEST)
        if bn_p is not None:
            inv = bn_p["gamma"] / jnp.sqrt(bn_p["var"] + 1e-5)
            out = out * inv[None, :, None, None] + \
                (bn_p["beta"] - bn_p["mean"] * inv)[None, :, None, None]
        if use_relu:
            out = jnp.maximum(out, 0.0)
        return out

    r_full = ref(x, weight, bn, True)
    r_plain = ref(x, weight, None, False)

    assert y_full.shape == (N, Cout, H, W) and y_full.dtype == x.dtype
    assert float(jnp.max(jnp.abs(y_full - r_full))) < 1e-2
    assert float(jnp.max(jnp.abs(y_plain - r_plain))) < 1e-2

    print("KERNEL_OK")
</pallas_src>

<mosaic_0001>
module attributes {stable_mosaic.version = 11 : i64} {
  func.func @_conv_bn_relu_kernel(%arg0: i32, %arg1: memref<1x18x18x4xf32, #tpu.memory_space<vmem>>, %arg2: memref<9x4x8xf32, #tpu.memory_space<vmem>>, %arg3: memref<1x8xf32, #tpu.memory_space<vmem>>, %arg4: memref<1x16x16x8xf32, #tpu.memory_space<vmem>>) attributes {dimension_semantics = [#tpu.dimension_semantics<parallel>], iteration_bounds = array<i64: 2>, scalar_prefetch = 0 : i64, scratch_operands = 0 : i64, tpu.core_type = #tpu.core_type<tc>, window_params = [{transform_indices = @transform_0, window_bounds = array<i64: 1, 18, 18, 4>}, {pipeline_mode = #tpu.pipeline_mode<synchronous>, transform_indices = @transform_1, window_bounds = array<i64: 9, 4, 8>}, {pipeline_mode = #tpu.pipeline_mode<synchronous>, transform_indices = @transform_2, window_bounds = array<i64: 1, 8>}, {transform_indices = @transform_3, window_bounds = array<i64: 1, 16, 16, 8>}]} {
    %cst = arith.constant 0.000000e+00 : f32
    %0 = vector.broadcast %cst : f32 to vector<256x8xf32>
    %c0 = arith.constant 0 : index
    %c0_0 = arith.constant 0 : index
    %c0_1 = arith.constant 0 : index
    %c0_2 = arith.constant 0 : index
    %1 = vector.load %arg1[%c0, %c0_0, %c0_1, %c0_2] : memref<1x18x18x4xf32, #tpu.memory_space<vmem>>, vector<1x16x16x4xf32>
    %2 = vector.shape_cast %1 : vector<1x16x16x4xf32> to vector<16x16x4xf32>
    %3 = vector.shape_cast %2 : vector<16x16x4xf32> to vector<256x4xf32>
    %c0_3 = arith.constant 0 : index
    %c0_4 = arith.constant 0 : index
    %c0_5 = arith.constant 0 : index
    %4 = vector.load %arg2[%c0_3, %c0_4, %c0_5] : memref<9x4x8xf32, #tpu.memory_space<vmem>>, vector<1x4x8xf32>
    %5 = vector.shape_cast %4 : vector<1x4x8xf32> to vector<4x8xf32>
    %cst_6 = arith.constant dense<0.000000e+00> : vector<256x8xf32>
    %6 = tpu.matmul %3, %5, %cst_6 {dimension_numbers = #tpu.dot_dimension_numbers<[1], [0], [0], [1], [0, 0, 1, 1], [], []>} : vector<256x4xf32>, vector<4x8xf32>, vector<256x8xf32> -> vector<256x8xf32>
    %7 = arith.addf %0, %6 : vector<256x8xf32>
    %c0_7 = arith.constant 0 : index
    %c0_8 = arith.constant 0 : index
    %c1 = arith.constant 1 : index
    %c0_9 = arith.constant 0 : index
    %8 = vector.load %arg1[%c0_7, %c0_8, %c1, %c0_9] : memref<1x18x18x4xf32, #tpu.memory_space<vmem>>, vector<1x16x16x4xf32>
    %9 = vector.shape_cast %8 : vector<1x16x16x4xf32> to vector<16x16x4xf32>
    %10 = vector.shape_cast %9 : vector<16x16x4xf32> to vector<256x4xf32>
    %c1_10 = arith.constant 1 : index
    %c0_11 = arith.constant 0 : index
    %c0_12 = arith.constant 0 : index
    %11 = vector.load %arg2[%c1_10, %c0_11, %c0_12] : memref<9x4x8xf32, #tpu.memory_space<vmem>>, vector<1x4x8xf32>
    %12 = vector.shape_cast %11 : vector<1x4x8xf32> to vector<4x8xf32>
    %cst_13 = arith.constant dense<0.000000e+00> : vector<256x8xf32>
    %13 = tpu.matmul %10, %12, %cst_13 {dimension_numbers = #tpu.dot_dimension_numbers<[1], [0], [0], [1], [0, 0, 1, 1], [], []>} : vector<256x4xf32>, vector<4x8xf32>, vector<256x8xf32> -> vector<256x8xf32>
    %14 = arith.addf %7, %13 : vector<256x8xf32>
    %c0_14 = arith.constant 0 : index
    %c0_15 = arith.constant 0 : index
    %c2 = arith.constant 2 : index
    %c0_16 = arith.constant 0 : index
    %15 = vector.load %arg1[%c0_14, %c0_15, %c2, %c0_16] : memref<1x18x18x4xf32, #tpu.memory_space<vmem>>, vector<1x16x16x4xf32>
    %16 = vector.shape_cast %15 : vector<1x16x16x4xf32> to vector<16x16x4xf32>
    %17 = vector.shape_cast %16 : vector<16x16x4xf32> to vector<256x4xf32>
    %c2_17 = arith.constant 2 : index
    %c0_18 = arith.constant 0 : index
    %c0_19 = arith.constant 0 : index
    %18 = vector.load %arg2[%c2_17, %c0_18, %c0_19] : memref<9x4x8xf32, #tpu.memory_space<vmem>>, vector<1x4x8xf32>
    %19 = vector.shape_cast %18 : vector<1x4x8xf32> to vector<4x8xf32>
    %cst_20 = arith.constant dense<0.000000e+00> : vector<256x8xf32>
    %20 = tpu.matmul %17, %19, %cst_20 {dimension_numbers = #tpu.dot_dimension_numbers<[1], [0], [0], [1], [0, 0, 1, 1], [], []>} : vector<256x4xf32>, vector<4x8xf32>, vector<256x8xf32> -> vector<256x8xf32>
    %21 = arith.addf %14, %20 : vector<256x8xf32>
    %c0_21 = arith.constant 0 : index
    %c1_22 = arith.constant 1 : index
    %c0_23 = arith.constant 0 : index
    %c0_24 = arith.constant 0 : index
    %22 = vector.load %arg1[%c0_21, %c1_22, %c0_23, %c0_24] : memref<1x18x18x4xf32, #tpu.memory_space<vmem>>, vector<1x16x16x4xf32>
    %23 = vector.shape_cast %22 : vector<1x16x16x4xf32> to vector<16x16x4xf32>
    %24 = vector.shape_cast %23 : vector<16x16x4xf32> to vector<256x4xf32>
    %c3 = arith.constant 3 : index
    %c0_25 = arith.constant 0 : index
    %c0_26 = arith.constant 0 : index
    %25 = vector.load %arg2[%c3, %c0_25, %c0_26] : memref<9x4x8xf32, #tpu.memory_space<vmem>>, vector<1x4x8xf32>
    %26 = vector.shape_cast %25 : vector<1x4x8xf32> to vector<4x8xf32>
    %cst_27 = arith.constant dense<0.000000e+00> : vector<256x8xf32>
    %27 = tpu.matmul %24, %26, %cst_27 {dimension_numbers = #tpu.dot_dimension_numbers<[1], [0], [0], [1], [0, 0, 1, 1], [], []>} : vector<256x4xf32>, vector<4x8xf32>, vector<256x8xf32> -> vector<256x8xf32>
    %28 = arith.addf %21, %27 : vector<256x8xf32>
    %c0_28 = arith.constant 0 : index
    %c1_29 = arith.constant 1 : index
    %c1_30 = arith.constant 1 : index
    %c0_31 = arith.constant 0 : index
    %29 = vector.load %arg1[%c0_28, %c1_29, %c1_30, %c0_31] : memref<1x18x18x4xf32, #tpu.memory_space<vmem>>, vector<1x16x16x4xf32>
    %30 = vector.shape_cast %29 : vector<1x16x16x4xf32> to vector<16x16x4xf32>
    %31 = vector.shape_cast %30 : vector<16x16x4xf32> to vector<256x4xf32>
    %c4 = arith.constant 4 : index
    %c0_32 = arith.constant 0 : index
    %c0_33 = arith.constant 0 : index
    %32 = vector.load %arg2[%c4, %c0_32, %c0_33] : memref<9x4x8xf32, #tpu.memory_space<vmem>>, vector<1x4x8xf32>
    %33 = vector.shape_cast %32 : vector<1x4x8xf32> to vector<4x8xf32>
    %cst_34 = arith.constant dense<0.000000e+00> : vector<256x8xf32>
    %34 = tpu.matmul %31, %33, %cst_34 {dimension_numbers = #tpu.dot_dimension_numbers<[1], [0], [0], [1], [0, 0, 1, 1], [], []>} : vector<256x4xf32>, vector<4x8xf32>, vector<256x8xf32> -> vector<256x8xf32>
    %35 = arith.addf %28, %34 : vector<256x8xf32>
    %c0_35 = arith.constant 0 : index
    %c1_36 = arith.constant 1 : index
    %c2_37 = arith.constant 2 : index
    %c0_38 = arith.constant 0 : index
    %36 = vector.load %arg1[%c0_35, %c1_36, %c2_37, %c0_38] : memref<1x18x18x4xf32, #tpu.memory_space<vmem>>, vector<1x16x16x4xf32>
    %37 = vector.shape_cast %36 : vector<1x16x16x4xf32> to vector<16x16x4xf32>
    %38 = vector.shape_cast %37 : vector<16x16x4xf32> to vector<256x4xf32>
    %c5 = arith.constant 5 : index
    %c0_39 = arith.constant 0 : index
    %c0_40 = arith.constant 0 : index
    %39 = vector.load %arg2[%c5, %c0_39, %c0_40] : memref<9x4x8xf32, #tpu.memory_space<vmem>>, vector<1x4x8xf32>
    %40 = vector.shape_cast %39 : vector<1x4x8xf32> to vector<4x8xf32>
    %cst_41 = arith.constant dense<0.000000e+00> : vector<256x8xf32>
    %41 = tpu.matmul %38, %40, %cst_41 {dimension_numbers = #tpu.dot_dimension_numbers<[1], [0], [0], [1], [0, 0, 1, 1], [], []>} : vector<256x4xf32>, vector<4x8xf32>, vector<256x8xf32> -> vector<256x8xf32>
    %42 = arith.addf %35, %41 : vector<256x8xf32>
    %c0_42 = arith.constant 0 : index
    %c2_43 = arith.constant 2 : index
    %c0_44 = arith.constant 0 : index
    %c0_45 = arith.constant 0 : index
    %43 = vector.load %arg1[%c0_42, %c2_43, %c0_44, %c0_45] : memref<1x18x18x4xf32, #tpu.memory_space<vmem>>, vector<1x16x16x4xf32>
    %44 = vector.shape_cast %43 : vector<1x16x16x4xf32> to vector<16x16x4xf32>
    %45 = vector.shape_cast %44 : vector<16x16x4xf32> to vector<256x4xf32>
    %c6 = arith.constant 6 : index
    %c0_46 = arith.constant 0 : index
    %c0_47 = arith.constant 0 : index
    %46 = vector.load %arg2[%c6, %c0_46, %c0_47] : memref<9x4x8xf32, #tpu.memory_space<vmem>>, vector<1x4x8xf32>
    %47 = vector.shape_cast %46 : vector<1x4x8xf32> to vector<4x8xf32>
    %cst_48 = arith.constant dense<0.000000e+00> : vector<256x8xf32>
    %48 = tpu.matmul %45, %47, %cst_48 {dimension_numbers = #tpu.dot_dimension_numbers<[1], [0], [0], [1], [0, 0, 1, 1], [], []>} : vector<256x4xf32>, vector<4x8xf32>, vector<256x8xf32> -> vector<256x8xf32>
    %49 = arith.addf %42, %48 : vector<256x8xf32>
    %c0_49 = arith.constant 0 : index
    %c2_50 = arith.constant 2 : index
    %c1_51 = arith.constant 1 : index
    %c0_52 = arith.constant 0 : index
    %50 = vector.load %arg1[%c0_49, %c2_50, %c1_51, %c0_52] : memref<1x18x18x4xf32, #tpu.memory_space<vmem>>, vector<1x16x16x4xf32>
    %51 = vector.shape_cast %50 : vector<1x16x16x4xf32> to vector<16x16x4xf32>
    %52 = vector.shape_cast %51 : vector<16x16x4xf32> to vector<256x4xf32>
    %c7 = arith.constant 7 : index
    %c0_53 = arith.constant 0 : index
    %c0_54 = arith.constant 0 : index
    %53 = vector.load %arg2[%c7, %c0_53, %c0_54] : memref<9x4x8xf32, #tpu.memory_space<vmem>>, vector<1x4x8xf32>
    %54 = vector.shape_cast %53 : vector<1x4x8xf32> to vector<4x8xf32>
    %cst_55 = arith.constant dense<0.000000e+00> : vector<256x8xf32>
    %55 = tpu.matmul %52, %54, %cst_55 {dimension_numbers = #tpu.dot_dimension_numbers<[1], [0], [0], [1], [0, 0, 1, 1], [], []>} : vector<256x4xf32>, vector<4x8xf32>, vector<256x8xf32> -> vector<256x8xf32>
    %56 = arith.addf %49, %55 : vector<256x8xf32>
    %c0_56 = arith.constant 0 : index
    %c2_57 = arith.constant 2 : index
    %c2_58 = arith.constant 2 : index
    %c0_59 = arith.constant 0 : index
    %57 = vector.load %arg1[%c0_56, %c2_57, %c2_58, %c0_59] : memref<1x18x18x4xf32, #tpu.memory_space<vmem>>, vector<1x16x16x4xf32>
    %58 = vector.shape_cast %57 : vector<1x16x16x4xf32> to vector<16x16x4xf32>
    %59 = vector.shape_cast %58 : vector<16x16x4xf32> to vector<256x4xf32>
    %c8 = arith.constant 8 : index
    %c0_60 = arith.constant 0 : index
    %c0_61 = arith.constant 0 : index
    %60 = vector.load %arg2[%c8, %c0_60, %c0_61] : memref<9x4x8xf32, #tpu.memory_space<vmem>>, vector<1x4x8xf32>
    %61 = vector.shape_cast %60 : vector<1x4x8xf32> to vector<4x8xf32>
    %cst_62 = arith.constant dense<0.000000e+00> : vector<256x8xf32>
    %62 = tpu.matmul %59, %61, %cst_62 {dimension_numbers = #tpu.dot_dimension_numbers<[1], [0], [0], [1], [0, 0, 1, 1], [], []>} : vector<256x4xf32>, vector<4x8xf32>, vector<256x8xf32> -> vector<256x8xf32>
    %63 = arith.addf %56, %62 : vector<256x8xf32>
    %c0_63 = arith.constant 0 : index
    %c0_64 = arith.constant 0 : index
    %64 = vector.load %arg3[%c0_63, %c0_64] : memref<1x8xf32, #tpu.memory_space<vmem>>, vector<1x8xf32>
    %65 = vector.broadcast %64 : vector<1x8xf32> to vector<256x8xf32>
    %66 = arith.addf %63, %65 : vector<256x8xf32>
    %cst_65 = arith.constant 0.000000e+00 : f32
    %67 = vector.broadcast %cst_65 : f32 to vector<256x8xf32>
    %68 = arith.maximumf %66, %67 : vector<256x8xf32>
    %69 = vector.shape_cast %68 : vector<256x8xf32> to vector<16x16x8xf32>
    %c0_66 = arith.constant 0 : index
    %c0_67 = arith.constant 0 : index
    %c0_68 = arith.constant 0 : index
    %c0_69 = arith.constant 0 : index
    %70 = vector.load %arg4[%c0_66, %c0_67, %c0_68, %c0_69] : memref<1x16x16x8xf32, #tpu.memory_space<vmem>>, vector<1x16x16x8xf32>
    %71 = vector.shape_cast %70 : vector<1x16x16x8xf32> to vector<16x16x8xf32>
    %72 = vector.shape_cast %69 : vector<16x16x8xf32> to vector<1x16x16x8xf32>
    tpu.vector_store %arg4[%c0_66, %c0_67, %c0_68, %c0_69], %72 {strides = array<i32>} : memref<1x16x16x8xf32, #tpu.memory_space<vmem>>, vector<1x16x16x8xf32>,
    return
  }
  func.func @transform_0(%arg0: i32) -> (i32, i32, i32, i32) {
    %c0_i32 = arith.constant 0 : i32
    %c0_i32_0 = arith.constant 0 : i32
    %c0_i32_1 = arith.constant 0 : i32
    %c0_i32_2 = arith.constant 0 : i32
    return %arg0, %c0_i32, %c0_i32_0, %c0_i32_1 : i32, i32, i32, i32
  }
  func.func @transform_1(%arg0: i32) -> (i32, i32, i32) {
    %c0_i32 = arith.constant 0 : i32
    %c0_i32_0 = arith.constant 0 : i32
    %c0_i32_1 = arith.constant 0 : i32
    %c0_i32_2 = arith.constant 0 : i32
    return %c0_i32, %c0_i32_0, %c0_i32_1 : i32, i32, i32
  }
  func.func @transform_2(%arg0: i32) -> (i32, i32) {
    %c0_i32 = arith.constant 0 : i32
    %c0_i32_0 = arith.constant 0 : i32
    %c0_i32_1 = arith.constant 0 : i32
    return %c0_i32, %c0_i32_0 : i32, i32
  }
  func.func @transform_3(%arg0: i32) -> (i32, i32, i32, i32) {
    %c0_i32 = arith.constant 0 : i32
    %c0_i32_0 = arith.constant 0 : i32
    %c0_i32_1 = arith.constant 0 : i32
    %c0_i32_2 = arith.constant 0 : i32
    return %arg0, %c0_i32, %c0_i32_0, %c0_i32_1 : i32, i32, i32, i32
  }
}

</mosaic_0001>

<llo_original>
// kernel: conv_bn_relu.1
$region0: #{conv_bn_relu.1}
  #allocation0 [shape = 'u32[]', space=smem, size = 0x4, offset = 0x4, fixed_abs, tag = 'smem constant byte address 0x4 - core index']
  #allocation1 [shape = 'u32[72,128]{1,0:T(1,128)}', space=vmem, size = 0x9000, scoped, tag = 'internal scratch']
  %s0 = inlined_call_operand.vmem [shape: f32[2,18,18,4], index: 0, kind: input, shape index: {}]
  %s1 = inlined_call_operand.vmem [shape: f32[9,4,8], index: 1, kind: input, shape index: {}]
  %s2 = inlined_call_operand.vmem [shape: f32[1,8], index: 2, kind: input, shape index: {}]
  %s3 = inlined_call_operand.vmem [shape: f32[2,16,16,8], index: 3, kind: output, shape index: {}]
  %s4 = sld [smem:[#allocation0]]
  $region45: #{conv_bn_relu.1} parent=0
    _
  %s6 = ssub.s32 1, %s4
  %s7 = scalar_select 0, %s6, %s4
  loop: start=0, step=1, limit=4
  $region2: #{conv_bn_relu.1} parent=0 // loop_pre_header
    _
  $region3: #{conv_bn_relu.1} parent=0 // loop_header
    %s9 = sphi 0, %s13
    %p10 = scmp.ge.s32.totalorder %s9, 4
    %s19 = sphi 0, %s21
    %s22 = sphi 0, %s19
    %s23 = sphi 0, %s22
    %s39 = sphi 0, %s23
    %s43 = sphi 0, %s43
    %s45 = sphi 0, %s43
    %s46 = sphi 0, %s45
    %s60 = sphi 0, %s46
    %s64 = sphi 0, %s64
    %s66 = sphi 0, %s64
    %s67 = sphi 0, %s66
    %s81 = sphi 0, %s67
    %s87 = sphi 0, %s89
    %s90 = sphi 0, %s87
    %s91 = sphi 0, %s90
    %s107 = sphi 0, %s91
  $region4: #{conv_bn_relu.1} parent=0 // loop_header_branch
    %12 = sbr.rel (%p10) target = $region8
  $region5: #{conv_bn_relu.1} parent=0 // loop_body
    %s14 = ssub.s32 %s9, 1
    %s15 = ssub.s32 %s9, 2
    %s16 = sadd.s32 %s9, 1
    %s17 = ssub.s32 %s9, %s16
    %p18 = scmp.eq.s32.totalorder %s17, 0
    %s20 = sadd.s32 %s19, 1
    %s21 = scalar_select %p18, %s19, %s20
    %p24 = pneg %p18
    %p25 = scmp.eq.s32.totalorder %s9, 1
    %p26 = por %p24, %p25
    %p27 = scmp.ne.s32.totalorder %s19, %s22
    %p28 = scmp.eq.s32.totalorder %s9, 0
    %p29 = por %p27, %p28
    %p30 = scmp.ne.s32.totalorder %s19, %s22
    %p31 = scmp.eq.s32.totalorder %s14, 1
    %p32 = por %p30, %p31
    %p33 = scmp.ne.s32.totalorder %s22, %s23
    %p34 = scmp.eq.s32.totalorder %s14, 0
    %p35 = por %p33, %p34
    %p36 = scmp.ne.s32.totalorder %s22, %s23
    %p37 = scmp.eq.s32.totalorder %s15, 1
    %p38 = por %p36, %p37
    %p40 = scmp.ne.s32.totalorder %s23, %s39
    %p41 = scmp.eq.s32.totalorder %s15, 0
    %p42 = por %p40, %p41
    %s44 = sadd.s32 %s43, 1
    %p47 = scmp.eq.s32.totalorder %s9, 1
    %p48 = scmp.ne.s32.totalorder %s43, %s45
    %p49 = scmp.eq.s32.totalorder %s9, 0
    %p50 = por %p48, %p49
    %p51 = scmp.ne.s32.totalorder %s43, %s45
    %p52 = scmp.eq.s32.totalorder %s14, 1
    %p53 = por %p51, %p52
    %p54 = scmp.ne.s32.totalorder %s45, %s46
    %p55 = scmp.eq.s32.totalorder %s14, 0
    %p56 = por %p54, %p55
    %p57 = scmp.ne.s32.totalorder %s45, %s46
    %p58 = scmp.eq.s32.totalorder %s15, 1
    %p59 = por %p57, %p58
    %p61 = scmp.ne.s32.totalorder %s46, %s60
    %p62 = scmp.eq.s32.totalorder %s15, 0
    %p63 = por %p61, %p62
    %s65 = sadd.s32 %s64, 1
    %p68 = scmp.eq.s32.totalorder %s9, 1
    %p69 = scmp.ne.s32.totalorder %s64, %s66
    %p70 = scmp.eq.s32.totalorder %s9, 0
    %p71 = por %p69, %p70
    %p72 = scmp.ne.s32.totalorder %s64, %s66
    %p73 = scmp.eq.s32.totalorder %s14, 1
    %p74 = por %p72, %p73
    %p75 = scmp.ne.s32.totalorder %s66, %s67
    %p76 = scmp.eq.s32.totalorder %s14, 0
    %p77 = por %p75, %p76
    %p78 = scmp.ne.s32.totalorder %s66, %s67
    %p79 = scmp.eq.s32.totalorder %s15, 1
    %p80 = por %p78, %p79
    %p82 = scmp.ne.s32.totalorder %s67, %s81
    %p83 = scmp.eq.s32.totalorder %s15, 0
    %p84 = por %p82, %p83
    %s85 = ssub.s32 %s9, %s16
    %p86 = scmp.eq.s32.totalorder %s85, 0
    %s88 = sadd.s32 %s87, 1
    %s89 = scalar_select %p86, %s87, %s88
    %p92 = pneg %p86
    %p93 = scmp.eq.s32.totalorder %s9, 1
    %p94 = por %p92, %p93
    %p95 = scmp.ne.s32.totalorder %s87, %s90
    %p96 = scmp.eq.s32.totalorder %s9, 0
    %p97 = por %p95, %p96
    %p98 = scmp.ne.s32.totalorder %s87, %s90
    %p99 = scmp.eq.s32.totalorder %s14, 1
    %p100 = por %p98, %p99
    %p101 = scmp.ne.s32.totalorder %s90, %s91
    %p102 = scmp.eq.s32.totalorder %s14, 0
    %p103 = por %p101, %p102
    %p104 = scmp.ne.s32.totalorder %s90, %s91
    %p105 = scmp.eq.s32.totalorder %s15, 1
    %p106 = por %p104, %p105
    %p108 = scmp.ne.s32.totalorder %s91, %s107
    %p109 = scmp.eq.s32.totalorder %s15, 0
    %p110 = por %p108, %p109
    %p111 = scmp.le.s32.totalorder 1, %s9
    %p112 = scmp.lt.s32.totalorder %s9, 3
    %p113 = pnand %p111, %p112
    %p114 = pneg %p113
    // Predicated region
    $region9: #{conv_bn_relu.1} parent=5 // pred_check
      _
    $region10: #{conv_bn_relu.1} parent=5 // pred_check_branch
      %116 = sbr.rel (%p113) target = $region12
    $region11: #{conv_bn_relu.1} parent=5 // pred_region
      %s117 = ssub.s32 %s9, 1
      // Predicated region
      $region13: #{conv_bn_relu.1} parent=11 // pred_check
        %p118 = pneg %p56
      $region14: #{conv_bn_relu.1} parent=11 // pred_check_branch
        %120 = sbr.rel (%p118) target = $region16
      $region15: #{conv_bn_relu.1} parent=11 // pred_region
        _
      $region16: #{conv_bn_relu.1} parent=11 // pred_fallthru
        _
      // Predicated region
      $region17: #{conv_bn_relu.1} parent=11 // pred_check
        %p121 = pneg %p77
      $region18: #{conv_bn_relu.1} parent=11 // pred_check_branch
        %123 = sbr.rel (%p121) target = $region20
      $region19: #{conv_bn_relu.1} parent=11 // pred_region
        _
      $region20: #{conv_bn_relu.1} parent=11 // pred_fallthru
        _
    $region12: #{conv_bn_relu.1} parent=5 // pred_fallthru
      _
    %p124 = scmp.lt.s32.totalorder %s9, 2
    // Predicated region
    $region21: #{conv_bn_relu.1} parent=5 // pred_check
      %p125 = pneg %p124
    $region22: #{conv_bn_relu.1} parent=5 // pred_check_branch
      %127 = sbr.rel (%p125) target = $region24
    $region23: #{conv_bn_relu.1} parent=5 // pred_region
      // Predicated region
      $region25: #{conv_bn_relu.1} parent=23 // pred_check
        %p128 = pneg %p29
      $region26: #{conv_bn_relu.1} parent=23 // pred_check_branch
        %130 = sbr.rel (%p128) target = $region28
      $region27: #{conv_bn_relu.1} parent=23 // pred_region
        %p131 = scmp.lt.s32.totalorder %s9, 1
        %s132 = scalar_select %p131, %s9, 1
        %s133 = smul.addr %s132, 54
        %s134 = smul.addr %s133, 8
        %s135 = scalar_lea.vmem %s0, %s134
      $region28: #{conv_bn_relu.1} parent=23 // pred_fallthru
        _
    $region24: #{conv_bn_relu.1} parent=5 // pred_fallthru
      _
    %p136 = scmp.le.s32.totalorder 1, %s9
    %p137 = scmp.lt.s32.totalorder %s9, 3
    %p138 = pnand %p136, %p137
    %p139 = pneg %p138
    // Predicated region
    $region29: #{conv_bn_relu.1} parent=5 // pred_check
      _
    $region30: #{conv_bn_relu.1} parent=5 // pred_check_branch
      %141 = sbr.rel (%p138) target = $region32
    $region31: #{conv_bn_relu.1} parent=5 // pred_region
      %s142 = ssub.s32 %s9, 1
      %p143 = scmp.lt.s32.totalorder %s14, 1
      %s144 = scalar_select %p143, %s14, 1
      %s145 = smul.addr %s144, 54
      %s146 = smul.addr %s145, 8
      %s147 = scalar_lea.vmem %s0, %s146
      %p148 = pneg %p35
      %p149 = pneg %p32
      %p150 = pneg %p56
      %p151 = pneg %p53
      %p152 = pneg %p77
      %p153 = pneg %p74
      %p154 = pneg %p103
      %p155 = pneg %p100
      %p156 = scmp.lt.s32.totalorder %s14, 1
      %s157 = scalar_select %p156, %s14, 1
      %s158 = smul.addr %s157, 32
      %s159 = smul.addr %s158, 8
      %s160 = scalar_lea.vmem %s3, %s159
      %p161 = scmp.lt.s32.totalorder %s14, 1
      %s162 = scalar_select %p161, %s14, 1
      %s163 = smul.addr %s162, 54
      %s164 = smul.addr %s163, 8
      %s165 = scalar_lea.vmem %s0, %s164
      %p166 = scmp.lt.s32.totalorder %s14, 1
      %s167 = scalar_select %p166, %s14, 1
      %s168 = smul.addr %s167, 32
      %s169 = smul.addr %s168, 8
      %s170 = scalar_lea.vmem %s3, %s169
      %v171 = vld [vmem:[%s165] sm:$0xff]
      %v172 = vld [vmem:[%s165 + $0x8] sm:$0xff]
      %v173 = vld [vmem:[%s165 + $0x18] sm:$0xff]
      %v174 = vld [vmem:[%s165 + $0x20] sm:$0xff]
      %v175 = vld [vmem:[%s165 + $0x30] sm:$0xff]
      %v176 = vld [vmem:[%s165 + $0x38] sm:$0xff]
      %v177 = vld [vmem:[%s165 + $0x48] sm:$0xff]
      %v178 = vld [vmem:[%s165 + $0x50] sm:$0xff]
      %v179 = vld [vmem:[%s165 + $0x60] sm:$0xff]
      %v180 = vld [vmem:[%s165 + $0x68] sm:$0xff]
      %v181 = vld [vmem:[%s165 + $0x78] sm:$0xff]
      %v182 = vld [vmem:[%s165 + $0x80] sm:$0xff]
      %v183 = vld [vmem:[%s165 + $0x90] sm:$0xff]
      %v184 = vld [vmem:[%s165 + $0x98] sm:$0xff]
      %v185 = vld [vmem:[%s165 + $0xa8] sm:$0xff]
      %v186 = vld [vmem:[%s165 + $0xb0] sm:$0xff]
      %v187 = vld [vmem:[%s165 + $0xc0] sm:$0xff]
      %v188 = vld [vmem:[%s165 + $0xc8] sm:$0xff]
      %v189 = vld [vmem:[%s165 + $0xd8] sm:$0xff]
      %v190 = vld [vmem:[%s165 + $0xe0] sm:$0xff]
      %v191 = vld [vmem:[%s165 + $0xf0] sm:$0xff]
      %v192 = vld [vmem:[%s165 + $0xf8] sm:$0xff]
      %v193 = vld [vmem:[%s165 + $0x108] sm:$0xff]
      %v194 = vld [vmem:[%s165 + $0x110] sm:$0xff]
      %v195 = vld [vmem:[%s165 + $0x120] sm:$0xff]
      %v196 = vld [vmem:[%s165 + $0x128] sm:$0xff]
      %v197 = vld [vmem:[%s165 + $0x138] sm:$0xff]
      %v198 = vld [vmem:[%s165 + $0x140] sm:$0xff]
      %v199 = vld [vmem:[%s165 + $0x150] sm:$0xff]
      %v200 = vld [vmem:[%s165 + $0x158] sm:$0xff]
      %v201 = vld [vmem:[%s165 + $0x168] sm:$0xff]
      %v202 = vld [vmem:[%s165 + $0x170] sm:$0xff]
      %v203 = vld [vmem:[%s1] sm:$0xf]
      %v204 = vld [vmem:[%s165 + $0x1] sm:$0xff]
      %v205 = vld [vmem:[%s165 + $0x9] sm:$0xff]
      %v206 = vld [vmem:[%s165 + $0x19] sm:$0xff]
      %v207 = vld [vmem:[%s165 + $0x21] sm:$0xff]
      %v208 = vld [vmem:[%s165 + $0x31] sm:$0xff]
      %v209 = vld [vmem:[%s165 + $0x39] sm:$0xff]
      %v210 = vld [vmem:[%s165 + $0x49] sm:$0xff]
      %v211 = vld [vmem:[%s165 + $0x51] sm:$0xff]
      %v212 = vld [vmem:[%s165 + $0x61] sm:$0xff]
      %v213 = vld [vmem:[%s165 + $0x69] sm:$0xff]
      %v214 = vld [vmem:[%s165 + $0x79] sm:$0xff]
      %v215 = vld [vmem:[%s165 + $0x81] sm:$0xff]
      %v216 = vld [vmem:[%s165 + $0x91] sm:$0xff]
      %v217 = vld [vmem:[%s165 + $0x99] sm:$0xff]
      %v218 = vld [vmem:[%s165 + $0xa9] sm:$0xff]
      %v219 = vld [vmem:[%s165 + $0xb1] sm:$0xff]
      %v220 = vld [vmem:[%s165 + $0xc1] sm:$0xff]
      %v221 = vld [vmem:[%s165 + $0xc9] sm:$0xff]
      %v222 = vld [vmem:[%s165 + $0xd9] sm:$0xff]
      %v223 = vld [vmem:[%s165 + $0xe1] sm:$0xff]
      %v224 = vld [vmem:[%s165 + $0xf1] sm:$0xff]
      %v225 = vld [vmem:[%s165 + $0xf9] sm:$0xff]
      %v226 = vld [vmem:[%s165 + $0x109] sm:$0xff]
      %v227 = vld [vmem:[%s165 + $0x111] sm:$0xff]
      %v228 = vld [vmem:[%s165 + $0x121] sm:$0xff]
      %v229 = vld [vmem:[%s165 + $0x129] sm:$0xff]
      %v230 = vld [vmem:[%s165 + $0x139] sm:$0xff]
      %v231 = vld [vmem:[%s165 + $0x141] sm:$0xff]
      %v232 = vld [vmem:[%s165 + $0x151] sm:$0xff]
      %v233 = vld [vmem:[%s165 + $0x159] sm:$0xff]
      %v234 = vld [vmem:[%s165 + $0x169] sm:$0xff]
      %v235 = vld [vmem:[%s165 + $0x171] sm:$0xff]
      %s236 = scalar_lea.vmem %s1, 4
      %v237 = vld [vmem:[%s236] sm:$0xf]
      %vm238 = vcmask 31744
      %v240 = vsel %vm238, %v204, 0
      %v243 = vsel %vm238, %v205, 0
      %v246 = vsel %vm238, %v206, 0
      %v249 = vsel %vm238, %v207, 0
      %v252 = vsel %vm238, %v208, 0
      %v255 = vsel %vm238, %v209, 0
      %v258 = vsel %vm238, %v210, 0
      %v261 = vsel %vm238, %v211, 0
      %v264 = vsel %vm238, %v212, 0
      %v267 = vsel %vm238, %v213, 0
      %v270 = vsel %vm238, %v214, 0
      %v273 = vsel %vm238, %v215, 0
      %v276 = vsel %vm238, %v216, 0
      %v279 = vsel %vm238, %v217, 0
      %v282 = vsel %vm238, %v218, 0
      %v285 = vsel %vm238, %v219, 0
      %v288 = vsel %vm238, %v220, 0
      %v291 = vsel %vm238, %v221, 0
      %v294 = vsel %vm238, %v222, 0
      %v297 = vsel %vm238, %v223, 0
      %v300 = vsel %vm238, %v224, 0
      %v303 = vsel %vm238, %v225, 0
      %v306 = vsel %vm238, %v226, 0
      %v309 = vsel %vm238, %v227, 0
      %v312 = vsel %vm238, %v228, 0
      %v315 = vsel %vm238, %v229, 0
      %v318 = vsel %vm238, %v230, 0
      %v321 = vsel %vm238, %v231, 0
      %v324 = vsel %vm238, %v232, 0
      %v327 = vsel %vm238, %v233, 0
      %v330 = vsel %vm238, %v234, 0
      %v333 = vsel %vm238, %v235, 0
      %vm335 = vcmask 1043456
      %v337 = vsel %vm335, %v237, 0
      %339 = vmatpush.msra.mxu0 0.0
      %340 = vmatpush.msra.mxu0 0.0
      %341 = vmatpush.msra.mxu0 0.0
      %342 = vmatpush.msra.mxu0 0.0
      %343 = vmatpush.msra.mxu0 0.0
      %344 = vmatpush.msra.mxu0 0.0
      %345 = vmatpush.msra.mxu0 0.0
      %346 = vmatpush.msra.mxu0 0.0
      %347 = vmatpush.msra.mxu0 0.0
      %348 = vmatpush.msra.mxu0 0.0
      %349 = vmatpush.msra.mxu0 0.0
      %350 = vmatpush.msra.mxu0 0.0
      %351 = vmatpush.msra.mxu0 0.0
      %352 = vmatpush.msra.mxu0 0.0
      %353 = vmatpush.msra.mxu0 0.0
      %354 = vmatpush.msra.mxu0 %v337
      %355 = vmatmul.f32.gmra.mxu0 %v240
      %v356 = vpop.f32.mrf.mxu0
      %v357 = vadd.f32 0.0, %v356
      %358 = vmatmul.f32.gmra.mxu0 %v243
      %v359 = vpop.f32.mrf.mxu0
      %v360 = vadd.f32 0.0, %v359
      %361 = vmatmul.f32.gmra.mxu0 %v246
      %v362 = vpop.f32.mrf.mxu0
      %v363 = vadd.f32 0.0, %v362
      %364 = vmatmul.f32.gmra.mxu0 %v249
      %v365 = vpop.f32.mrf.mxu0
      %v366 = vadd.f32 0.0, %v365
      %367 = vmatmul.f32.gmra.mxu0 %v252
      %v368 = vpop.f32.mrf.mxu0
      %v369 = vadd.f32 0.0, %v368
      %370 = vmatmul.f32.gmra.mxu0 %v255
      %v371 = vpop.f32.mrf.mxu0
      %v372 = vadd.f32 0.0, %v371
      %373 = vmatmul.f32.gmra.mxu0 %v258
      %v374 = vpop.f32.mrf.mxu0
      %v375 = vadd.f32 0.0, %v374
      %376 = vmatmul.f32.gmra.mxu0 %v261
      %v377 = vpop.f32.mrf.mxu0
      %v378 = vadd.f32 0.0, %v377
      %379 = vmatmul.f32.gmra.mxu0 %v264
      %v380 = vpop.f32.mrf.mxu0
      %v381 = vadd.f32 0.0, %v380
      %382 = vmatmul.f32.gmra.mxu0 %v267
      %v383 = vpop.f32.mrf.mxu0
      %v384 = vadd.f32 0.0, %v383
      %385 = vmatmul.f32.gmra.mxu0 %v270
      %v386 = vpop.f32.mrf.mxu0
      %v387 = vadd.f32 0.0, %v386
      %388 = vmatmul.f32.gmra.mxu0 %v273
      %v389 = vpop.f32.mrf.mxu0
      %v390 = vadd.f32 0.0, %v389
      %391 = vmatmul.f32.gmra.mxu0 %v276
      %v392 = vpop.f32.mrf.mxu0
      %v393 = vadd.f32 0.0, %v392
      %394 = vmatmul.f32.gmra.mxu0 %v279
      %v395 = vpop.f32.mrf.mxu0
      %v396 = vadd.f32 0.0, %v395
      %397 = vmatmul.f32.gmra.mxu0 %v282
      %v398 = vpop.f32.mrf.mxu0
      %v399 = vadd.f32 0.0, %v398
      %400 = vmatmul.f32.gmra.mxu0 %v285
      %v401 = vpop.f32.mrf.mxu0
      %v402 = vadd.f32 0.0, %v401
      %403 = vmatmul.f32.gmra.mxu0 %v288
      %v404 = vpop.f32.mrf.mxu0
      %v405 = vadd.f32 0.0, %v404
      %406 = vmatmul.f32.gmra.mxu0 %v291
      %v407 = vpop.f32.mrf.mxu0
      %v408 = vadd.f32 0.0, %v407
      %409 = vmatmul.f32.gmra.mxu0 %v294
      %v410 = vpop.f32.mrf.mxu0
      %v411 = vadd.f32 0.0, %v410
      %412 = vmatmul.f32.gmra.mxu0 %v297
      %v413 = vpop.f32.mrf.mxu0
      %v414 = vadd.f32 0.0, %v413
      %415 = vmatmul.f32.gmra.mxu0 %v300
      %v416 = vpop.f32.mrf.mxu0
      %v417 = vadd.f32 0.0, %v416
      %418 = vmatmul.f32.gmra.mxu0 %v303
      %v419 = vpop.f32.mrf.mxu0
      %v420 = vadd.f32 0.0, %v419
      %421 = vmatmul.f32.gmra.mxu0 %v306
      %v422 = vpop.f32.mrf.mxu0
      %v423 = vadd.f32 0.0, %v422
      %424 = vmatmul.f32.gmra.mxu0 %v309
      %v425 = vpop.f32.mrf.mxu0
      %v426 = vadd.f32 0.0, %v425
      %427 = vmatmul.f32.gmra.mxu0 %v312
      %v428 = vpop.f32.mrf.mxu0
      %v429 = vadd.f32 0.0, %v428
      %430 = vmatmul.f32.gmra.mxu0 %v315
      %v431 = vpop.f32.mrf.mxu0
      %v432 = vadd.f32 0.0, %v431
      %433 = vmatmul.f32.gmra.mxu0 %v318
      %v434 = vpop.f32.mrf.mxu0
      %v435 = vadd.f32 0.0, %v434
      %436 = vmatmul.f32.gmra.mxu0 %v321
      %v437 = vpop.f32.mrf.mxu0
      %v438 = vadd.f32 0.0, %v437
      %439 = vmatmul.f32.gmra.mxu0 %v324
      %v440 = vpop.f32.mrf.mxu0
      %v441 = vadd.f32 0.0, %v440
      %442 = vmatmul.f32.gmra.mxu0 %v327
      %v443 = vpop.f32.mrf.mxu0
      %v444 = vadd.f32 0.0, %v443
      %445 = vmatmul.f32.gmra.mxu0 %v330
      %v446 = vpop.f32.mrf.mxu0
      %v447 = vadd.f32 0.0, %v446
      %448 = vmatmul.f32.gmra.mxu0 %v333
      %v449 = vpop.f32.mrf.mxu0
      %v450 = vadd.f32 0.0, %v449
      %451 = vdwg.mxu0
      %v453 = vsel %vm238, %v171, 0
      %v456 = vsel %vm238, %v172, 0
      %v459 = vsel %vm238, %v173, 0
      %v462 = vsel %vm238, %v174, 0
      %v465 = vsel %vm238, %v175, 0
      %v468 = vsel %vm238, %v176, 0
      %v471 = vsel %vm238, %v177, 0
      %v474 = vsel %vm238, %v178, 0
      %v477 = vsel %vm238, %v179, 0
      %v480 = vsel %vm238, %v180, 0
      %v483 = vsel %vm238, %v181, 0
      %v486 = vsel %vm238, %v182, 0
      %v489 = vsel %vm238, %v183, 0
      %v492 = vsel %vm238, %v184, 0
      %v495 = vsel %vm238, %v185, 0
      %v498 = vsel %vm238, %v186, 0
      %v501 = vsel %vm238, %v187, 0
      %v504 = vsel %vm238, %v188, 0
      %v507 = vsel %vm238, %v189, 0
      %v510 = vsel %vm238, %v190, 0
      %v513 = vsel %vm238, %v191, 0
      %v516 = vsel %vm238, %v192, 0
      %v519 = vsel %vm238, %v193, 0
      %v522 = vsel %vm238, %v194, 0
      %v525 = vsel %vm238, %v195, 0
      %v528 = vsel %vm238, %v196, 0
      %v531 = vsel %vm238, %v197, 0
      %v534 = vsel %vm238, %v198, 0
      %v537 = vsel %vm238, %v199, 0
      %v540 = vsel %vm238, %v200, 0
      %v543 = vsel %vm238, %v201, 0
      %v546 = vsel %vm238, %v202, 0
      %v549 = vsel %vm335, %v203, 0
      %551 = vmatpush.msra.mxu0 0.0
      %552 = vmatpush.msra.mxu0 0.0
      %553 = vmatpush.msra.mxu0 0.0
      %554 = vmatpush.msra.mxu0 0.0
      %555 = vmatpush.msra.mxu0 0.0
      %556 = vmatpush.msra.mxu0 0.0
      %557 = vmatpush.msra.mxu0 0.0
      %558 = vmatpush.msra.mxu0 0.0
      %559 = vmatpush.msra.mxu0 0.0
      %560 = vmatpush.msra.mxu0 0.0
      %561 = vmatpush.msra.mxu0 0.0
      %562 = vmatpush.msra.mxu0 0.0
      %563 = vmatpush.msra.mxu0 0.0
      %564 = vmatpush.msra.mxu0 0.0
      %565 = vmatpush.msra.mxu0 0.0
      %566 = vmatpush.msra.mxu0 %v549
      %567 = vmatmul.f32.gmra.mxu0 %v453
      %v568 = vpop.f32.mrf.mxu0
      %v569 = vadd.f32 %v357, %v568
      %570 = vmatmul.f32.gmra.mxu0 %v456
      %v571 = vpop.f32.mrf.mxu0
      %v572 = vadd.f32 %v360, %v571
      %573 = vmatmul.f32.gmra.mxu0 %v459
      %v574 = vpop.f32.mrf.mxu0
      %v575 = vadd.f32 %v363, %v574
      %576 = vmatmul.f32.gmra.mxu0 %v462
      %v577 = vpop.f32.mrf.mxu0
      %v578 = vadd.f32 %v366, %v577
      %579 = vmatmul.f32.gmra.mxu0 %v465
      %v580 = vpop.f32.mrf.mxu0
      %v581 = vadd.f32 %v369, %v580
      %582 = vmatmul.f32.gmra.mxu0 %v468
      %v583 = vpop.f32.mrf.mxu0
      %v584 = vadd.f32 %v372, %v583
      %585 = vmatmul.f32.gmra.mxu0 %v471
      %v586 = vpop.f32.mrf.mxu0
      %v587 = vadd.f32 %v375, %v586
      %588 = vmatmul.f32.gmra.mxu0 %v474
      %v589 = vpop.f32.mrf.mxu0
      %v590 = vadd.f32 %v378, %v589
      %591 = vmatmul.f32.gmra.mxu0 %v477
      %v592 = vpop.f32.mrf.mxu0
      %v593 = vadd.f32 %v381, %v592
      %594 = vmatmul.f32.gmra.mxu0 %v480
      %v595 = vpop.f32.mrf.mxu0
      %v596 = vadd.f32 %v384, %v595
      %597 = vmatmul.f32.gmra.mxu0 %v483
      %v598 = vpop.f32.mrf.mxu0
      %v599 = vadd.f32 %v387, %v598
      %600 = vmatmul.f32.gmra.mxu0 %v486
      %v601 = vpop.f32.mrf.mxu0
      %v602 = vadd.f32 %v390, %v601
      %603 = vmatmul.f32.gmra.mxu0 %v489
      %v604 = vpop.f32.mrf.mxu0
      %v605 = vadd.f32 %v393, %v604
      %606 = vmatmul.f32.gmra.mxu0 %v492
      %v607 = vpop.f32.mrf.mxu0
      %v608 = vadd.f32 %v396, %v607
      %609 = vmatmul.f32.gmra.mxu0 %v495
      %v610 = vpop.f32.mrf.mxu0
      %v611 = vadd.f32 %v399, %v610
      %612 = vmatmul.f32.gmra.mxu0 %v498
      %v613 = vpop.f32.mrf.mxu0
      %v614 = vadd.f32 %v402, %v613
      %615 = vmatmul.f32.gmra.mxu0 %v501
      %v616 = vpop.f32.mrf.mxu0
      %v617 = vadd.f32 %v405, %v616
      %618 = vmatmul.f32.gmra.mxu0 %v504
      %v619 = vpop.f32.mrf.mxu0
      %v620 = vadd.f32 %v408, %v619
      %621 = vmatmul.f32.gmra.mxu0 %v507
      %v622 = vpop.f32.mrf.mxu0
      %v623 = vadd.f32 %v411, %v622
      %624 = vmatmul.f32.gmra.mxu0 %v510
      %v625 = vpop.f32.mrf.mxu0
      %v626 = vadd.f32 %v414, %v625
      %627 = vmatmul.f32.gmra.mxu0 %v513
      %v628 = vpop.f32.mrf.mxu0
      %v629 = vadd.f32 %v417, %v628
      %630 = vmatmul.f32.gmra.mxu0 %v516
      %v631 = vpop.f32.mrf.mxu0
      %v632 = vadd.f32 %v420, %v631
      %633 = vmatmul.f32.gmra.mxu0 %v519
      %v634 = vpop.f32.mrf.mxu0
      %v635 = vadd.f32 %v423, %v634
      %636 = vmatmul.f32.gmra.mxu0 %v522
      %v637 = vpop.f32.mrf.mxu0
      %v638 = vadd.f32 %v426, %v637
      %639 = vmatmul.f32.gmra.mxu0 %v525
      %v640 = vpop.f32.mrf.mxu0
      %v641 = vadd.f32 %v429, %v640
      %642 = vmatmul.f32.gmra.mxu0 %v528
      %v643 = vpop.f32.mrf.mxu0
      %v644 = vadd.f32 %v432, %v643
      %645 = vmatmul.f32.gmra.mxu0 %v531
      %v646 = vpop.f32.mrf.mxu0
      %v647 = vadd.f32 %v435, %v646
      %648 = vmatmul.f32.gmra.mxu0 %v534
      %v649 = vpop.f32.mrf.mxu0
      %v650 = vadd.f32 %v438, %v649
      %651 = vmatmul.f32.gmra.mxu0 %v537
      %v652 = vpop.f32.mrf.mxu0
      %v653 = vadd.f32 %v441, %v652
      %654 = vmatmul.f32.gmra.mxu0 %v540
      %v655 = vpop.f32.mrf.mxu0
      %v656 = vadd.f32 %v444, %v655
      %657 = vmatmul.f32.gmra.mxu0 %v543
      %v658 = vpop.f32.mrf.mxu0
      %v659 = vadd.f32 %v447, %v658
      %660 = vmatmul.f32.gmra.mxu0 %v546
      %v661 = vpop.f32.mrf.mxu0
      %v662 = vadd.f32 %v450, %v661
      %663 = vdwg.mxu0
      %v664 = vld [vmem:[%s165 + $0x2] sm:$0xff]
      %v665 = vld [vmem:[%s165 + $0xa] sm:$0xff]
      %v666 = vld [vmem:[%s165 + $0x1a] sm:$0xff]
      %v667 = vld [vmem:[%s165 + $0x22] sm:$0xff]
      %v668 = vld [vmem:[%s165 + $0x32] sm:$0xff]
      %v669 = vld [vmem:[%s165 + $0x3a] sm:$0xff]
      %v670 = vld [vmem:[%s165 + $0x4a] sm:$0xff]
      %v671 = vld [vmem:[%s165 + $0x52] sm:$0xff]
      %v672 = vld [vmem:[%s165 + $0x62] sm:$0xff]
      %v673 = vld [vmem:[%s165 + $0x6a] sm:$0xff]
      %v674 = vld [vmem:[%s165 + $0x7a] sm:$0xff]
      %v675 = vld [vmem:[%s165 + $0x82] sm:$0xff]
      %v676 = vld [vmem:[%s165 + $0x92] sm:$0xff]
      %v677 = vld [vmem:[%s165 + $0x9a] sm:$0xff]
      %v678 = vld [vmem:[%s165 + $0xaa] sm:$0xff]
      %v679 = vld [vmem:[%s165 + $0xb2] sm:$0xff]
      %v680 = vld [vmem:[%s165 + $0xc2] sm:$0xff]
      %v681 = vld [vmem:[%s165 + $0xca] sm:$0xff]
      %v682 = vld [vmem:[%s165 + $0xda] sm:$0xff]
      %v683 = vld [vmem:[%s165 + $0xe2] sm:$0xff]
      %v684 = vld [vmem:[%s165 + $0xf2] sm:$0xff]
      %v685 = vld [vmem:[%s165 + $0xfa] sm:$0xff]
      %v686 = vld [vmem:[%s165 + $0x10a] sm:$0xff]
      %v687 = vld [vmem:[%s165 + $0x112] sm:$0xff]
      %v688 = vld [vmem:[%s165 + $0x122] sm:$0xff]
      %v689 = vld [vmem:[%s165 + $0x12a] sm:$0xff]
      %v690 = vld [vmem:[%s165 + $0x13a] sm:$0xff]
      %v691 = vld [vmem:[%s165 + $0x142] sm:$0xff]
      %v692 = vld [vmem:[%s165 + $0x152] sm:$0xff]
      %v693 = vld [vmem:[%s165 + $0x15a] sm:$0xff]
      %v694 = vld [vmem:[%s165 + $0x16a] sm:$0xff]
      %v695 = vld [vmem:[%s165 + $0x172] sm:$0xff]
      %s696 = scalar_lea.vmem %s1, 8
      %v697 = vld [vmem:[%s696] sm:$0xf]
      %v699 = vsel %vm238, %v664, 0
      %v702 = vsel %vm238, %v665, 0
      %v705 = vsel %vm238, %v666, 0
      %v708 = vsel %vm238, %v667, 0
      %v711 = vsel %vm238, %v668, 0
      %v714 = vsel %vm238, %v669, 0
      %v717 = vsel %vm238, %v670, 0
      %v720 = vsel %vm238, %v671, 0
      %v723 = vsel %vm238, %v672, 0
      %v726 = vsel %vm238, %v673, 0
      %v729 = vsel %vm238, %v674, 0
      %v732 = vsel %vm238, %v675, 0
      %v735 = vsel %vm238, %v676, 0
      %v738 = vsel %vm238, %v677, 0
      %v741 = vsel %vm238, %v678, 0
      %v744 = vsel %vm238, %v679, 0
      %v747 = vsel %vm238, %v680, 0
      %v750 = vsel %vm238, %v681, 0
      %v753 = vsel %vm238, %v682, 0
      %v756 = vsel %vm238, %v683, 0
      %v759 = vsel %vm238, %v684, 0
      %v762 = vsel %vm238, %v685, 0
      %v765 = vsel %vm238, %v686, 0
      %v768 = vsel %vm238, %v687, 0
      %v771 = vsel %vm238, %v688, 0
      %v774 = vsel %vm238, %v689, 0
      %v777 = vsel %vm238, %v690, 0
      %v780 = vsel %vm238, %v691, 0
      %v783 = vsel %vm238, %v692, 0
      %v786 = vsel %vm238, %v693, 0
      %v789 = vsel %vm238, %v694, 0
      %v792 = vsel %vm238, %v695, 0
      %v795 = vsel %vm335, %v697, 0
      %797 = vmatpush.msra.mxu0 0.0
      %798 = vmatpush.msra.mxu0 0.0
      %799 = vmatpush.msra.mxu0 0.0
      %800 = vmatpush.msra.mxu0 0.0
      %801 = vmatpush.msra.mxu0 0.0
      %802 = vmatpush.msra.mxu0 0.0
      %803 = vmatpush.msra.mxu0 0.0
      %804 = vmatpush.msra.mxu0 0.0
      %805 = vmatpush.msra.mxu0 0.0
      %806 = vmatpush.msra.mxu0 0.0
      %807 = vmatpush.msra.mxu0 0.0
      %808 = vmatpush.msra.mxu0 0.0
      %809 = vmatpush.msra.mxu0 0.0
      %810 = vmatpush.msra.mxu0 0.0
      %811 = vmatpush.msra.mxu0 0.0
      %812 = vmatpush.msra.mxu0 %v795
      %813 = vmatmul.f32.gmra.mxu0 %v699
      %v814 = vpop.f32.mrf.mxu0
      %v815 = vadd.f32 0.0, %v814
      %816 = vmatmul.f32.gmra.mxu0 %v702
      %v817 = vpop.f32.mrf.mxu0
      %v818 = vadd.f32 0.0, %v817
      %819 = vmatmul.f32.gmra.mxu0 %v705
      %v820 = vpop.f32.mrf.mxu0
      %v821 = vadd.f32 0.0, %v820
      %822 = vmatmul.f32.gmra.mxu0 %v708
      %v823 = vpop.f32.mrf.mxu0
      %v824 = vadd.f32 0.0, %v823
      %825 = vmatmul.f32.gmra.mxu0 %v711
      %v826 = vpop.f32.mrf.mxu0
      %v827 = vadd.f32 0.0, %v826
      %828 = vmatmul.f32.gmra.mxu0 %v714
      %v829 = vpop.f32.mrf.mxu0
      %v830 = vadd.f32 0.0, %v829
      %831 = vmatmul.f32.gmra.mxu0 %v717
      %v832 = vpop.f32.mrf.mxu0
      %v833 = vadd.f32 0.0, %v832
      %834 = vmatmul.f32.gmra.mxu0 %v720
      %v835 = vpop.f32.mrf.mxu0
      %v836 = vadd.f32 0.0, %v835
      %837 = vmatmul.f32.gmra.mxu0 %v723
      %v838 = vpop.f32.mrf.mxu0
      %v839 = vadd.f32 0.0, %v838
      %840 = vmatmul.f32.gmra.mxu0 %v726
      %v841 = vpop.f32.mrf.mxu0
      %v842 = vadd.f32 0.0, %v841
      %843 = vmatmul.f32.gmra.mxu0 %v729
      %v844 = vpop.f32.mrf.mxu0
      %v845 = vadd.f32 0.0, %v844
      %846 = vmatmul.f32.gmra.mxu0 %v732
      %v847 = vpop.f32.mrf.mxu0
      %v848 = vadd.f32 0.0, %v847
      %849 = vmatmul.f32.gmra.mxu0 %v735
      %v850 = vpop.f32.mrf.mxu0
      %v851 = vadd.f32 0.0, %v850
      %852 = vmatmul.f32.gmra.mxu0 %v738
      %v853 = vpop.f32.mrf.mxu0
      %v854 = vadd.f32 0.0, %v853
      %855 = vmatmul.f32.gmra.mxu0 %v741
      %v856 = vpop.f32.mrf.mxu0
      %v857 = vadd.f32 0.0, %v856
      %858 = vmatmul.f32.gmra.mxu0 %v744
      %v859 = vpop.f32.mrf.mxu0
      %v860 = vadd.f32 0.0, %v859
      %861 = vmatmul.f32.gmra.mxu0 %v747
      %v862 = vpop.f32.mrf.mxu0
      %v863 = vadd.f32 0.0, %v862
      %864 = vmatmul.f32.gmra.mxu0 %v750
      %v865 = vpop.f32.mrf.mxu0
      %v866 = vadd.f32 0.0, %v865
      %867 = vmatmul.f32.gmra.mxu0 %v753
      %v868 = vpop.f32.mrf.mxu0
      %v869 = vadd.f32 0.0, %v868
      %870 = vmatmul.f32.gmra.mxu0 %v756
      %v871 = vpop.f32.mrf.mxu0
      %v872 = vadd.f32 0.0, %v871
      %873 = vmatmul.f32.gmra.mxu0 %v759
      %v874 = vpop.f32.mrf.mxu0
      %v875 = vadd.f32 0.0, %v874
      %876 = vmatmul.f32.gmra.mxu0 %v762
      %v877 = vpop.f32.mrf.mxu0
      %v878 = vadd.f32 0.0, %v877
      %879 = vmatmul.f32.gmra.mxu0 %v765
      %v880 = vpop.f32.mrf.mxu0
      %v881 = vadd.f32 0.0, %v880
      %882 = vmatmul.f32.gmra.mxu0 %v768
      %v883 = vpop.f32.mrf.mxu0
      %v884 = vadd.f32 0.0, %v883
      %885 = vmatmul.f32.gmra.mxu0 %v771
      %v886 = vpop.f32.mrf.mxu0
      %v887 = vadd.f32 0.0, %v886
      %888 = vmatmul.f32.gmra.mxu0 %v774
      %v889 = vpop.f32.mrf.mxu0
      %v890 = vadd.f32 0.0, %v889
      %891 = vmatmul.f32.gmra.mxu0 %v777
      %v892 = vpop.f32.mrf.mxu0
      %v893 = vadd.f32 0.0, %v892
      %894 = vmatmul.f32.gmra.mxu0 %v780
      %v895 = vpop.f32.mrf.mxu0
      %v896 = vadd.f32 0.0, %v895
      %897 = vmatmul.f32.gmra.mxu0 %v783
      %v898 = vpop.f32.mrf.mxu0
      %v899 = vadd.f32 0.0, %v898
      %900 = vmatmul.f32.gmra.mxu0 %v786
      %v901 = vpop.f32.mrf.mxu0
      %v902 = vadd.f32 0.0, %v901
      %903 = vmatmul.f32.gmra.mxu0 %v789
      %v904 = vpop.f32.mrf.mxu0
      %v905 = vadd.f32 0.0, %v904
      %906 = vmatmul.f32.gmra.mxu0 %v792
      %v907 = vpop.f32.mrf.mxu0
      %v908 = vadd.f32 0.0, %v907
      %909 = vdwg.mxu0
      %v910 = vadd.f32 %v569, %v815
      %v911 = vadd.f32 %v572, %v818
      %v912 = vadd.f32 %v575, %v821
      %v913 = vadd.f32 %v578, %v824
      %v914 = vadd.f32 %v581, %v827
      %v915 = vadd.f32 %v584, %v830
      %v916 = vadd.f32 %v587, %v833
      %v917 = vadd.f32 %v590, %v836
      %v918 = vadd.f32 %v593, %v839
      %v919 = vadd.f32 %v596, %v842
      %v920 = vadd.f32 %v599, %v845
      %v921 = vadd.f32 %v602, %v848
      %v922 = vadd.f32 %v605, %v851
      %v923 = vadd.f32 %v608, %v854
      %v924 = vadd.f32 %v611, %v857
      %v925 = vadd.f32 %v614, %v860
      %v926 = vadd.f32 %v617, %v863
      %v927 = vadd.f32 %v620, %v866
      %v928 = vadd.f32 %v623, %v869
      %v929 = vadd.f32 %v626, %v872
      %v930 = vadd.f32 %v629, %v875
      %v931 = vadd.f32 %v632, %v878
      %v932 = vadd.f32 %v635, %v881
      %v933 = vadd.f32 %v638, %v884
      %v934 = vadd.f32 %v641, %v887
      %v935 = vadd.f32 %v644, %v890
      %v936 = vadd.f32 %v647, %v893
      %v937 = vadd.f32 %v650, %v896
      %v938 = vadd.f32 %v653, %v899
      %v939 = vadd.f32 %v656, %v902
      %v940 = vadd.f32 %v659, %v905
      %v941 = vadd.f32 %v662, %v908
      %s942 = scalar_lea.vmem %s165, 24
      %v943 = vld [vmem:[%s942] sm:$0xff]
      %v944 = vld [vmem:[%s942 + $0x8] sm:$0xff]
      %v945 = vld [vmem:[%s942 + $0x18] sm:$0xff]
      %v946 = vld [vmem:[%s942 + $0x20] sm:$0xff]
      %v947 = vld [vmem:[%s942 + $0x30] sm:$0xff]
      %v948 = vld [vmem:[%s942 + $0x38] sm:$0xff]
      %v949 = vld [vmem:[%s942 + $0x48] sm:$0xff]
      %v950 = vld [vmem:[%s942 + $0x50] sm:$0xff]
      %v951 = vld [vmem:[%s942 + $0x60] sm:$0xff]
      %v952 = vld [vmem:[%s942 + $0x68] sm:$0xff]
      %v953 = vld [vmem:[%s942 + $0x78] sm:$0xff]
      %v954 = vld [vmem:[%s942 + $0x80] sm:$0xff]
      %v955 = vld [vmem:[%s942 + $0x90] sm:$0xff]
      %v956 = vld [vmem:[%s942 + $0x98] sm:$0xff]
      %v957 = vld [vmem:[%s942 + $0xa8] sm:$0xff]
      %v958 = vld [vmem:[%s942 + $0xb0] sm:$0xff]
      %v959 = vld [vmem:[%s942 + $0xc0] sm:$0xff]
      %v960 = vld [vmem:[%s942 + $0xc8] sm:$0xff]
      %v961 = vld [vmem:[%s942 + $0xd8] sm:$0xff]
      %v962 = vld [vmem:[%s942 + $0xe0] sm:$0xff]
      %v963 = vld [vmem:[%s942 + $0xf0] sm:$0xff]
      %v964 = vld [vmem:[%s942 + $0xf8] sm:$0xff]
      %v965 = vld [vmem:[%s942 + $0x108] sm:$0xff]
      %v966 = vld [vmem:[%s942 + $0x110] sm:$0xff]
      %v967 = vld [vmem:[%s942 + $0x120] sm:$0xff]
      %v968 = vld [vmem:[%s942 + $0x128] sm:$0xff]
      %v969 = vld [vmem:[%s942 + $0x138] sm:$0xff]
      %v970 = vld [vmem:[%s942 + $0x140] sm:$0xff]
      %v971 = vld [vmem:[%s942 + $0x150] sm:$0xff]
      %v972 = vld [vmem:[%s942 + $0x158] sm:$0xff]
      %v973 = vld [vmem:[%s942 + $0x168] sm:$0xff]
      %v974 = vld [vmem:[%s942 + $0x170] sm:$0xff]
      %s975 = scalar_lea.vmem %s1, 12
      %v976 = vld [vmem:[%s975] sm:$0xf]
      %v978 = vsel %vm238, %v943, 0
      %v981 = vsel %vm238, %v944, 0
      %v984 = vsel %vm238, %v945, 0
      %v987 = vsel %vm238, %v946, 0
      %v990 = vsel %vm238, %v947, 0
      %v993 = vsel %vm238, %v948, 0
      %v996 = vsel %vm238, %v949, 0
      %v999 = vsel %vm238, %v950, 0
      %v1002 = vsel %vm238, %v951, 0
      %v1005 = vsel %vm238, %v952, 0
      %v1008 = vsel %vm238, %v953, 0
      %v1011 = vsel %vm238, %v954, 0
      %v1014 = vsel %vm238, %v955, 0
      %v1017 = vsel %vm238, %v956, 0
      %v1020 = vsel %vm238, %v957, 0
      %v1023 = vsel %vm238, %v958, 0
      %v1026 = vsel %vm238, %v959, 0
      %v1029 = vsel %vm238, %v960, 0
      %v1032 = vsel %vm238, %v961, 0
      %v1035 = vsel %vm238, %v962, 0
      %v1038 = vsel %vm238, %v963, 0
      %v1041 = vsel %vm238, %v964, 0
      %v1044 = vsel %vm238, %v965, 0
      %v1047 = vsel %vm238, %v966, 0
      %v1050 = vsel %vm238, %v967, 0
      %v1053 = vsel %vm238, %v968, 0
      %v1056 = vsel %vm238, %v969, 0
      %v1059 = vsel %vm238, %v970, 0
      %v1062 = vsel %vm238, %v971, 0
      %v1065 = vsel %vm238, %v972, 0
      %v1068 = vsel %vm238, %v973, 0
      %v1071 = vsel %vm238, %v974, 0
      %v1074 = vsel %vm335, %v976, 0
      %1076 = vmatpush.msra.mxu0 0.0
      %1077 = vmatpush.msra.mxu0 0.0
      %1078 = vmatpush.msra.mxu0 0.0
      %1079 = vmatpush.msra.mxu0 0.0
      %1080 = vmatpush.msra.mxu0 0.0
      %1081 = vmatpush.msra.mxu0 0.0
      %1082 = vmatpush.msra.mxu0 0.0
      %1083 = vmatpush.msra.mxu0 0.0
      %1084 = vmatpush.msra.mxu0 0.0
      %1085 = vmatpush.msra.mxu0 0.0
      %1086 = vmatpush.msra.mxu0 0.0
      %1087 = vmatpush.msra.mxu0 0.0
      %1088 = vmatpush.msra.mxu0 0.0
      %1089 = vmatpush.msra.mxu0 0.0
      %1090 = vmatpush.msra.mxu0 0.0
      %1091 = vmatpush.msra.mxu0 %v1074
      %1092 = vmatmul.f32.gmra.mxu0 %v978
      %v1093 = vpop.f32.mrf.mxu0
      %v1094 = vadd.f32 0.0, %v1093
      %1095 = vmatmul.f32.gmra.mxu0 %v981
      %v1096 = vpop.f32.mrf.mxu0
      %v1097 = vadd.f32 0.0, %v1096
      %1098 = vmatmul.f32.gmra.mxu0 %v984
      %v1099 = vpop.f32.mrf.mxu0
      %v1100 = vadd.f32 0.0, %v1099
      %1101 = vmatmul.f32.gmra.mxu0 %v987
      %v1102 = vpop.f32.mrf.mxu0
      %v1103 = vadd.f32 0.0, %v1102
      %1104 = vmatmul.f32.gmra.mxu0 %v990
      %v1105 = vpop.f32.mrf.mxu0
      %v1106 = vadd.f32 0.0, %v1105
      %1107 = vmatmul.f32.gmra.mxu0 %v993
      %v1108 = vpop.f32.mrf.mxu0
      %v1109 = vadd.f32 0.0, %v1108
      %1110 = vmatmul.f32.gmra.mxu0 %v996
      %v1111 = vpop.f32.mrf.mxu0
      %v1112 = vadd.f32 0.0, %v1111
      %1113 = vmatmul.f32.gmra.mxu0 %v999
      %v1114 = vpop.f32.mrf.mxu0
      %v1115 = vadd.f32 0.0, %v1114
      %1116 = vmatmul.f32.gmra.mxu0 %v1002
      %v1117 = vpop.f32.mrf.mxu0
      %v1118 = vadd.f32 0.0, %v1117
      %1119 = vmatmul.f32.gmra.mxu0 %v1005
      %v1120 = vpop.f32.mrf.mxu0
      %v1121 = vadd.f32 0.0, %v1120
      %1122 = vmatmul.f32.gmra.mxu0 %v1008
      %v1123 = vpop.f32.mrf.mxu0
      %v1124 = vadd.f32 0.0, %v1123
      %1125 = vmatmul.f32.gmra.mxu0 %v1011
      %v1126 = vpop.f32.mrf.mxu0
      %v1127 = vadd.f32 0.0, %v1126
      %1128 = vmatmul.f32.gmra.mxu0 %v1014
      %v1129 = vpop.f32.mrf.mxu0
      %v1130 = vadd.f32 0.0, %v1129
      %1131 = vmatmul.f32.gmra.mxu0 %v1017
      %v1132 = vpop.f32.mrf.mxu0
      %v1133 = vadd.f32 0.0, %v1132
      %1134 = vmatmul.f32.gmra.mxu0 %v1020
      %v1135 = vpop.f32.mrf.mxu0
      %v1136 = vadd.f32 0.0, %v1135
      %1137 = vmatmul.f32.gmra.mxu0 %v1023
      %v1138 = vpop.f32.mrf.mxu0
      %v1139 = vadd.f32 0.0, %v1138
      %1140 = vmatmul.f32.gmra.mxu0 %v1026
      %v1141 = vpop.f32.mrf.mxu0
      %v1142 = vadd.f32 0.0, %v1141
      %1143 = vmatmul.f32.gmra.mxu0 %v1029
      %v1144 = vpop.f32.mrf.mxu0
      %v1145 = vadd.f32 0.0, %v1144
      %1146 = vmatmul.f32.gmra.mxu0 %v1032
      %v1147 = vpop.f32.mrf.mxu0
      %v1148 = vadd.f32 0.0, %v1147
      %1149 = vmatmul.f32.gmra.mxu0 %v1035
      %v1150 = vpop.f32.mrf.mxu0
      %v1151 = vadd.f32 0.0, %v1150
      %1152 = vmatmul.f32.gmra.mxu0 %v1038
      %v1153 = vpop.f32.mrf.mxu0
      %v1154 = vadd.f32 0.0, %v1153
      %1155 = vmatmul.f32.gmra.mxu0 %v1041
      %v1156 = vpop.f32.mrf.mxu0
      %v1157 = vadd.f32 0.0, %v1156
      %1158 = vmatmul.f32.gmra.mxu0 %v1044
      %v1159 = vpop.f32.mrf.mxu0
      %v1160 = vadd.f32 0.0, %v1159
      %1161 = vmatmul.f32.gmra.mxu0 %v1047
      %v1162 = vpop.f32.mrf.mxu0
      %v1163 = vadd.f32 0.0, %v1162
      %1164 = vmatmul.f32.gmra.mxu0 %v1050
      %v1165 = vpop.f32.mrf.mxu0
      %v1166 = vadd.f32 0.0, %v1165
      %1167 = vmatmul.f32.gmra.mxu0 %v1053
      %v1168 = vpop.f32.mrf.mxu0
      %v1169 = vadd.f32 0.0, %v1168
      %1170 = vmatmul.f32.gmra.mxu0 %v1056
      %v1171 = vpop.f32.mrf.mxu0
      %v1172 = vadd.f32 0.0, %v1171
      %1173 = vmatmul.f32.gmra.mxu0 %v1059
      %v1174 = vpop.f32.mrf.mxu0
      %v1175 = vadd.f32 0.0, %v1174
      %1176 = vmatmul.f32.gmra.mxu0 %v1062
      %v1177 = vpop.f32.mrf.mxu0
      %v1178 = vadd.f32 0.0, %v1177
      %1179 = vmatmul.f32.gmra.mxu0 %v1065
      %v1180 = vpop.f32.mrf.mxu0
      %v1181 = vadd.f32 0.0, %v1180
      %1182 = vmatmul.f32.gmra.mxu0 %v1068
      %v1183 = vpop.f32.mrf.mxu0
      %v1184 = vadd.f32 0.0, %v1183
      %1185 = vmatmul.f32.gmra.mxu0 %v1071
      %v1186 = vpop.f32.mrf.mxu0
      %v1187 = vadd.f32 0.0, %v1186
      %1188 = vdwg.mxu0
      %v1189 = vadd.f32 %v910, %v1094
      %v1190 = vadd.f32 %v911, %v1097
      %v1191 = vadd.f32 %v912, %v1100
      %v1192 = vadd.f32 %v913, %v1103
      %v1193 = vadd.f32 %v914, %v1106
      %v1194 = vadd.f32 %v915, %v1109
      %v1195 = vadd.f32 %v916, %v1112
      %v1196 = vadd.f32 %v917, %v1115
      %v1197 = vadd.f32 %v918, %v1118
      %v1198 = vadd.f32 %v919, %v1121
      %v1199 = vadd.f32 %v920, %v1124
      %v1200 = vadd.f32 %v921, %v1127
      %v1201 = vadd.f32 %v922, %v1130
      %v1202 = vadd.f32 %v923, %v1133
      %v1203 = vadd.f32 %v924, %v1136
      %v1204 = vadd.f32 %v925, %v1139
      %v1205 = vadd.f32 %v926, %v1142
      %v1206 = vadd.f32 %v927, %v1145
      %v1207 = vadd.f32 %v928, %v1148
      %v1208 = vadd.f32 %v929, %v1151
      %v1209 = vadd.f32 %v930, %v1154
      %v1210 = vadd.f32 %v931, %v1157
      %v1211 = vadd.f32 %v932, %v1160
      %v1212 = vadd.f32 %v933, %v1163
      %v1213 = vadd.f32 %v934, %v1166
      %v1214 = vadd.f32 %v935, %v1169
      %v1215 = vadd.f32 %v936, %v1172
      %v1216 = vadd.f32 %v937, %v1175
      %v1217 = vadd.f32 %v938, %v1178
      %v1218 = vadd.f32 %v939, %v1181
      %v1219 = vadd.f32 %v940, %v1184
      %v1220 = vadd.f32 %v941, %v1187
      %v1221 = vld [vmem:[%s942 + $0x1] sm:$0xff]
      %v1222 = vld [vmem:[%s942 + $0x9] sm:$0xff]
      %v1223 = vld [vmem:[%s942 + $0x19] sm:$0xff]
      %v1224 = vld [vmem:[%s942 + $0x21] sm:$0xff]
      %v1225 = vld [vmem:[%s942 + $0x31] sm:$0xff]
      %v1226 = vld [vmem:[%s942 + $0x39] sm:$0xff]
      %v1227 = vld [vmem:[%s942 + $0x49] sm:$0xff]
      %v1228 = vld [vmem:[%s942 + $0x51] sm:$0xff]
      %v1229 = vld [vmem:[%s942 + $0x61] sm:$0xff]
      %v1230 = vld [vmem:[%s942 + $0x69] sm:$0xff]
      %v1231 = vld [vmem:[%s942 + $0x79] sm:$0xff]
      %v1232 = vld [vmem:[%s942 + $0x81] sm:$0xff]
      %v1233 = vld [vmem:[%s942 + $0x91] sm:$0xff]
      %v1234 = vld [vmem:[%s942 + $0x99] sm:$0xff]
      %v1235 = vld [vmem:[%s942 + $0xa9] sm:$0xff]
      %v1236 = vld [vmem:[%s942 + $0xb1] sm:$0xff]
      %v1237 = vld [vmem:[%s942 + $0xc1] sm:$0xff]
      %v1238 = vld [vmem:[%s942 + $0xc9] sm:$0xff]
      %v1239 = vld [vmem:[%s942 + $0xd9] sm:$0xff]
      %v1240 = vld [vmem:[%s942 + $0xe1] sm:$0xff]
      %v1241 = vld [vmem:[%s942 + $0xf1] sm:$0xff]
      %v1242 = vld [vmem:[%s942 + $0xf9] sm:$0xff]
      %v1243 = vld [vmem:[%s942 + $0x109] sm:$0xff]
      %v1244 = vld [vmem:[%s942 + $0x111] sm:$0xff]
      %v1245 = vld [vmem:[%s942 + $0x121] sm:$0xff]
      %v1246 = vld [vmem:[%s942 + $0x129] sm:$0xff]
      %v1247 = vld [vmem:[%s942 + $0x139] sm:$0xff]
      %v1248 = vld [vmem:[%s942 + $0x141] sm:$0xff]
      %v1249 = vld [vmem:[%s942 + $0x151] sm:$0xff]
      %v1250 = vld [vmem:[%s942 + $0x159] sm:$0xff]
      %v1251 = vld [vmem:[%s942 + $0x169] sm:$0xff]
      %v1252 = vld [vmem:[%s942 + $0x171] sm:$0xff]
      %s1253 = scalar_lea.vmem %s1, 16
      %v1254 = vld [vmem:[%s1253] sm:$0xf]
      %v1256 = vsel %vm238, %v1221, 0
      %v1259 = vsel %vm238, %v1222, 0
      %v1262 = vsel %vm238, %v1223, 0
      %v1265 = vsel %vm238, %v1224, 0
      %v1268 = vsel %vm238, %v1225, 0
      %v1271 = vsel %vm238, %v1226, 0
      %v1274 = vsel %vm238, %v1227, 0
      %v1277 = vsel %vm238, %v1228, 0
      %v1280 = vsel %vm238, %v1229, 0
      %v1283 = vsel %vm238, %v1230, 0
      %v1286 = vsel %vm238, %v1231, 0
      %v1289 = vsel %vm238, %v1232, 0
      %v1292 = vsel %vm238, %v1233, 0
      %v1295 = vsel %vm238, %v1234, 0
      %v1298 = vsel %vm238, %v1235, 0
      %v1301 = vsel %vm238, %v1236, 0
      %v1304 = vsel %vm238, %v1237, 0
      %v1307 = vsel %vm238, %v1238, 0
      %v1310 = vsel %vm238, %v1239, 0
      %v1313 = vsel %vm238, %v1240, 0
      %v1316 = vsel %vm238, %v1241, 0
      %v1319 = vsel %vm238, %v1242, 0
      %v1322 = vsel %vm238, %v1243, 0
      %v1325 = vsel %vm238, %v1244, 0
      %v1328 = vsel %vm238, %v1245, 0
      %v1331 = vsel %vm238, %v1246, 0
      %v1334 = vsel %vm238, %v1247, 0
      %v1337 = vsel %vm238, %v1248, 0
      %v1340 = vsel %vm238, %v1249, 0
      %v1343 = vsel %vm238, %v1250, 0
      %v1346 = vsel %vm238, %v1251, 0
      %v1349 = vsel %vm238, %v1252, 0
      %v1352 = vsel %vm335, %v1254, 0
      %1354 = vmatpush.msra.mxu0 0.0
      %1355 = vmatpush.msra.mxu0 0.0
      %1356 = vmatpush.msra.mxu0 0.0
      %1357 = vmatpush.msra.mxu0 0.0
      %1358 = vmatpush.msra.mxu0 0.0
      %1359 = vmatpush.msra.mxu0 0.0
      %1360 = vmatpush.msra.mxu0 0.0
      %1361 = vmatpush.msra.mxu0 0.0
      %1362 = vmatpush.msra.mxu0 0.0
      %1363 = vmatpush.msra.mxu0 0.0
      %1364 = vmatpush.msra.mxu0 0.0
      %1365 = vmatpush.msra.mxu0 0.0
      %1366 = vmatpush.msra.mxu0 0.0
      %1367 = vmatpush.msra.mxu0 0.0
      %1368 = vmatpush.msra.mxu0 0.0
      %1369 = vmatpush.msra.mxu0 %v1352
      %1370 = vmatmul.f32.gmra.mxu0 %v1256
      %v1371 = vpop.f32.mrf.mxu0
      %v1372 = vadd.f32 0.0, %v1371
      %1373 = vmatmul.f32.gmra.mxu0 %v1259
      %v1374 = vpop.f32.mrf.mxu0
      %v1375 = vadd.f32 0.0, %v1374
      %1376 = vmatmul.f32.gmra.mxu0 %v1262
      %v1377 = vpop.f32.mrf.mxu0
      %v1378 = vadd.f32 0.0, %v1377
      %1379 = vmatmul.f32.gmra.mxu0 %v1265
      %v1380 = vpop.f32.mrf.mxu0
      %v1381 = vadd.f32 0.0, %v1380
      %1382 = vmatmul.f32.gmra.mxu0 %v1268
      %v1383 = vpop.f32.mrf.mxu0
      %v1384 = vadd.f32 0.0, %v1383
      %1385 = vmatmul.f32.gmra.mxu0 %v1271
      %v1386 = vpop.f32.mrf.mxu0
      %v1387 = vadd.f32 0.0, %v1386
      %1388 = vmatmul.f32.gmra.mxu0 %v1274
      %v1389 = vpop.f32.mrf.mxu0
      %v1390 = vadd.f32 0.0, %v1389
      %1391 = vmatmul.f32.gmra.mxu0 %v1277
      %v1392 = vpop.f32.mrf.mxu0
      %v1393 = vadd.f32 0.0, %v1392
      %1394 = vmatmul.f32.gmra.mxu0 %v1280
      %v1395 = vpop.f32.mrf.mxu0
      %v1396 = vadd.f32 0.0, %v1395
      %1397 = vmatmul.f32.gmra.mxu0 %v1283
      %v1398 = vpop.f32.mrf.mxu0
      %v1399 = vadd.f32 0.0, %v1398
      %1400 = vmatmul.f32.gmra.mxu0 %v1286
      %v1401 = vpop.f32.mrf.mxu0
      %v1402 = vadd.f32 0.0, %v1401
      %1403 = vmatmul.f32.gmra.mxu0 %v1289
      %v1404 = vpop.f32.mrf.mxu0
      %v1405 = vadd.f32 0.0, %v1404
      %1406 = vmatmul.f32.gmra.mxu0 %v1292
      %v1407 = vpop.f32.mrf.mxu0
      %v1408 = vadd.f32 0.0, %v1407
      %1409 = vmatmul.f32.gmra.mxu0 %v1295
      %v1410 = vpop.f32.mrf.mxu0
      %v1411 = vadd.f32 0.0, %v1410
      %1412 = vmatmul.f32.gmra.mxu0 %v1298
      %v1413 = vpop.f32.mrf.mxu0
      %v1414 = vadd.f32 0.0, %v1413
      %1415 = vmatmul.f32.gmra.mxu0 %v1301
      %v1416 = vpop.f32.mrf.mxu0
      %v1417 = vadd.f32 0.0, %v1416
      %1418 = vmatmul.f32.gmra.mxu0 %v1304
      %v1419 = vpop.f32.mrf.mxu0
      %v1420 = vadd.f32 0.0, %v1419
      %1421 = vmatmul.f32.gmra.mxu0 %v1307
      %v1422 = vpop.f32.mrf.mxu0
      %v1423 = vadd.f32 0.0, %v1422
      %1424 = vmatmul.f32.gmra.mxu0 %v1310
      %v1425 = vpop.f32.mrf.mxu0
      %v1426 = vadd.f32 0.0, %v1425
      %1427 = vmatmul.f32.gmra.mxu0 %v1313
      %v1428 = vpop.f32.mrf.mxu0
      %v1429 = vadd.f32 0.0, %v1428
      %1430 = vmatmul.f32.gmra.mxu0 %v1316
      %v1431 = vpop.f32.mrf.mxu0
      %v1432 = vadd.f32 0.0, %v1431
      %1433 = vmatmul.f32.gmra.mxu0 %v1319
      %v1434 = vpop.f32.mrf.mxu0
      %v1435 = vadd.f32 0.0, %v1434
      %1436 = vmatmul.f32.gmra.mxu0 %v1322
      %v1437 = vpop.f32.mrf.mxu0
      %v1438 = vadd.f32 0.0, %v1437
      %1439 = vmatmul.f32.gmra.mxu0 %v1325
      %v1440 = vpop.f32.mrf.mxu0
      %v1441 = vadd.f32 0.0, %v1440
      %1442 = vmatmul.f32.gmra.mxu0 %v1328
      %v1443 = vpop.f32.mrf.mxu0
      %v1444 = vadd.f32 0.0, %v1443
      %1445 = vmatmul.f32.gmra.mxu0 %v1331
      %v1446 = vpop.f32.mrf.mxu0
      %v1447 = vadd.f32 0.0, %v1446
      %1448 = vmatmul.f32.gmra.mxu0 %v1334
      %v1449 = vpop.f32.mrf.mxu0
      %v1450 = vadd.f32 0.0, %v1449
      %1451 = vmatmul.f32.gmra.mxu0 %v1337
      %v1452 = vpop.f32.mrf.mxu0
      %v1453 = vadd.f32 0.0, %v1452
      %1454 = vmatmul.f32.gmra.mxu0 %v1340
      %v1455 = vpop.f32.mrf.mxu0
      %v1456 = vadd.f32 0.0, %v1455
      %1457 = vmatmul.f32.gmra.mxu0 %v1343
      %v1458 = vpop.f32.mrf.mxu0
      %v1459 = vadd.f32 0.0, %v1458
      %1460 = vmatmul.f32.gmra.mxu0 %v1346
      %v1461 = vpop.f32.mrf.mxu0
      %v1462 = vadd.f32 0.0, %v1461
      %1463 = vmatmul.f32.gmra.mxu0 %v1349
      %v1464 = vpop.f32.mrf.mxu0
      %v1465 = vadd.f32 0.0, %v1464
      %1466 = vdwg.mxu0
      %v1467 = vadd.f32 %v1189, %v1372
      %v1468 = vadd.f32 %v1190, %v1375
      %v1469 = vadd.f32 %v1191, %v1378
      %v1470 = vadd.f32 %v1192, %v1381
      %v1471 = vadd.f32 %v1193, %v1384
      %v1472 = vadd.f32 %v1194, %v1387
      %v1473 = vadd.f32 %v1195, %v1390
      %v1474 = vadd.f32 %v1196, %v1393
      %v1475 = vadd.f32 %v1197, %v1396
      %v1476 = vadd.f32 %v1198, %v1399
      %v1477 = vadd.f32 %v1199, %v1402
      %v1478 = vadd.f32 %v1200, %v1405
      %v1479 = vadd.f32 %v1201, %v1408
      %v1480 = vadd.f32 %v1202, %v1411
      %v1481 = vadd.f32 %v1203, %v1414
      %v1482 = vadd.f32 %v1204, %v1417
      %v1483 = vadd.f32 %v1205, %v1420
      %v1484 = vadd.f32 %v1206, %v1423
      %v1485 = vadd.f32 %v1207, %v1426
      %v1486 = vadd.f32 %v1208, %v1429
      %v1487 = vadd.f32 %v1209, %v1432
      %v1488 = vadd.f32 %v1210, %v1435
      %v1489 = vadd.f32 %v1211, %v1438
      %v1490 = vadd.f32 %v1212, %v1441
      %v1491 = vadd.f32 %v1213, %v1444
      %v1492 = vadd.f32 %v1214, %v1447
      %v1493 = vadd.f32 %v1215, %v1450
      %v1494 = vadd.f32 %v1216, %v1453
      %v1495 = vadd.f32 %v1217, %v1456
      %v1496 = vadd.f32 %v1218, %v1459
      %v1497 = vadd.f32 %v1219, %v1462
      %v1498 = vadd.f32 %v1220, %v1465
      %v1499 = vld [vmem:[%s942 + $0x2] sm:$0xff]
      %v1500 = vld [vmem:[%s942 + $0xa] sm:$0xff]
      %v1501 = vld [vmem:[%s942 + $0x1a] sm:$0xff]
      %v1502 = vld [vmem:[%s942 + $0x22] sm:$0xff]
      %v1503 = vld [vmem:[%s942 + $0x32] sm:$0xff]
      %v1504 = vld [vmem:[%s942 + $0x3a] sm:$0xff]
      %v1505 = vld [vmem:[%s942 + $0x4a] sm:$0xff]
      %v1506 = vld [vmem:[%s942 + $0x52] sm:$0xff]
      %v1507 = vld [vmem:[%s942 + $0x62] sm:$0xff]
      %v1508 = vld [vmem:[%s942 + $0x6a] sm:$0xff]
      %v1509 = vld [vmem:[%s942 + $0x7a] sm:$0xff]
      %v1510 = vld [vmem:[%s942 + $0x82] sm:$0xff]
      %v1511 = vld [vmem:[%s942 + $0x92] sm:$0xff]
      %v1512 = vld [vmem:[%s942 + $0x9a] sm:$0xff]
      %v1513 = vld [vmem:[%s942 + $0xaa] sm:$0xff]
      %v1514 = vld [vmem:[%s942 + $0xb2] sm:$0xff]
      %v1515 = vld [vmem:[%s942 + $0xc2] sm:$0xff]
      %v1516 = vld [vmem:[%s942 + $0xca] sm:$0xff]
      %v1517 = vld [vmem:[%s942 + $0xda] sm:$0xff]
      %v1518 = vld [vmem:[%s942 + $0xe2] sm:$0xff]
      %v1519 = vld [vmem:[%s942 + $0xf2] sm:$0xff]
      %v1520 = vld [vmem:[%s942 + $0xfa] sm:$0xff]
      %v1521 = vld [vmem:[%s942 + $0x10a] sm:$0xff]
      %v1522 = vld [vmem:[%s942 + $0x112] sm:$0xff]
      %v1523 = vld [vmem:[%s942 + $0x122] sm:$0xff]
      %v1524 = vld [vmem:[%s942 + $0x12a] sm:$0xff]
      %v1525 = vld [vmem:[%s942 + $0x13a] sm:$0xff]
      %v1526 = vld [vmem:[%s942 + $0x142] sm:$0xff]
      %v1527 = vld [vmem:[%s942 + $0x152] sm:$0xff]
      %v1528 = vld [vmem:[%s942 + $0x15a] sm:$0xff]
      %v1529 = vld [vmem:[%s942 + $0x16a] sm:$0xff]
      %v1530 = vld [vmem:[%s942 + $0x172] sm:$0xff]
      %s1531 = scalar_lea.vmem %s1, 20
      %v1532 = vld [vmem:[%s1531] sm:$0xf]
      %v1534 = vsel %vm238, %v1499, 0
      %v1537 = vsel %vm238, %v1500, 0
      %v1540 = vsel %vm238, %v1501, 0
      %v1543 = vsel %vm238, %v1502, 0
      %v1546 = vsel %vm238, %v1503, 0
      %v1549 = vsel %vm238, %v1504, 0
      %v1552 = vsel %vm238, %v1505, 0
      %v1555 = vsel %vm238, %v1506, 0
      %v1558 = vsel %vm238, %v1507, 0
      %v1561 = vsel %vm238, %v1508, 0
      %v1564 = vsel %vm238, %v1509, 0
      %v1567 = vsel %vm238, %v1510, 0
      %v1570 = vsel %vm238, %v1511, 0
      %v1573 = vsel %vm238, %v1512, 0
      %v1576 = vsel %vm238, %v1513, 0
      %v1579 = vsel %vm238, %v1514, 0
      %v1582 = vsel %vm238, %v1515, 0
      %v1585 = vsel %vm238, %v1516, 0
      %v1588 = vsel %vm238, %v1517, 0
      %v1591 = vsel %vm238, %v1518, 0
      %v1594 = vsel %vm238, %v1519, 0
      %v1597 = vsel %vm238, %v1520, 0
      %v1600 = vsel %vm238, %v1521, 0
      %v1603 = vsel %vm238, %v1522, 0
      %v1606 = vsel %vm238, %v1523, 0
      %v1609 = vsel %vm238, %v1524, 0
      %v1612 = vsel %vm238, %v1525, 0
      %v1615 = vsel %vm238, %v1526, 0
      %v1618 = vsel %vm238, %v1527, 0
      %v1621 = vsel %vm238, %v1528, 0
      %v1624 = vsel %vm238, %v1529, 0
      %v1627 = vsel %vm238, %v1530, 0
      %v1630 = vsel %vm335, %v1532, 0
      %1632 = vmatpush.msra.mxu0 0.0
      %1633 = vmatpush.msra.mxu0 0.0
      %1634 = vmatpush.msra.mxu0 0.0
      %1635 = vmatpush.msra.mxu0 0.0
      %1636 = vmatpush.msra.mxu0 0.0
      %1637 = vmatpush.msra.mxu0 0.0
      %1638 = vmatpush.msra.mxu0 0.0
      %1639 = vmatpush.msra.mxu0 0.0
      %1640 = vmatpush.msra.mxu0 0.0
      %1641 = vmatpush.msra.mxu0 0.0
      %1642 = vmatpush.msra.mxu0 0.0
      %1643 = vmatpush.msra.mxu0 0.0
      %1644 = vmatpush.msra.mxu0 0.0
      %1645 = vmatpush.msra.mxu0 0.0
      %1646 = vmatpush.msra.mxu0 0.0
      %1647 = vmatpush.msra.mxu0 %v1630
      %1648 = vmatmul.f32.gmra.mxu0 %v1534
      %v1649 = vpop.f32.mrf.mxu0
      %v1650 = vadd.f32 0.0, %v1649
      %1651 = vmatmul.f32.gmra.mxu0 %v1537
      %v1652 = vpop.f32.mrf.mxu0
      %v1653 = vadd.f32 0.0, %v1652
      %1654 = vmatmul.f32.gmra.mxu0 %v1540
      %v1655 = vpop.f32.mrf.mxu0
      %v1656 = vadd.f32 0.0, %v1655
      %1657 = vmatmul.f32.gmra.mxu0 %v1543
      %v1658 = vpop.f32.mrf.mxu0
      %v1659 = vadd.f32 0.0, %v1658
      %1660 = vmatmul.f32.gmra.mxu0 %v1546
      %v1661 = vpop.f32.mrf.mxu0
      %v1662 = vadd.f32 0.0, %v1661
      %1663 = vmatmul.f32.gmra.mxu0 %v1549
      %v1664 = vpop.f32.mrf.mxu0
      %v1665 = vadd.f32 0.0, %v1664
      %1666 = vmatmul.f32.gmra.mxu0 %v1552
      %v1667 = vpop.f32.mrf.mxu0
      %v1668 = vadd.f32 0.0, %v1667
      %1669 = vmatmul.f32.gmra.mxu0 %v1555
      %v1670 = vpop.f32.mrf.mxu0
      %v1671 = vadd.f32 0.0, %v1670
      %1672 = vmatmul.f32.gmra.mxu0 %v1558
      %v1673 = vpop.f32.mrf.mxu0
      %v1674 = vadd.f32 0.0, %v1673
      %1675 = vmatmul.f32.gmra.mxu0 %v1561
      %v1676 = vpop.f32.mrf.mxu0
      %v1677 = vadd.f32 0.0, %v1676
      %1678 = vmatmul.f32.gmra.mxu0 %v1564
      %v1679 = vpop.f32.mrf.mxu0
      %v1680 = vadd.f32 0.0, %v1679
      %1681 = vmatmul.f32.gmra.mxu0 %v1567
      %v1682 = vpop.f32.mrf.mxu0
      %v1683 = vadd.f32 0.0, %v1682
      %1684 = vmatmul.f32.gmra.mxu0 %v1570
      %v1685 = vpop.f32.mrf.mxu0
      %v1686 = vadd.f32 0.0, %v1685
      %1687 = vmatmul.f32.gmra.mxu0 %v1573
      %v1688 = vpop.f32.mrf.mxu0
      %v1689 = vadd.f32 0.0, %v1688
      %1690 = vmatmul.f32.gmra.mxu0 %v1576
      %v1691 = vpop.f32.mrf.mxu0
      %v1692 = vadd.f32 0.0, %v1691
      %1693 = vmatmul.f32.gmra.mxu0 %v1579
      %v1694 = vpop.f32.mrf.mxu0
      %v1695 = vadd.f32 0.0, %v1694
      %1696 = vmatmul.f32.gmra.mxu0 %v1582
      %v1697 = vpop.f32.mrf.mxu0
      %v1698 = vadd.f32 0.0, %v1697
      %1699 = vmatmul.f32.gmra.mxu0 %v1585
      %v1700 = vpop.f32.mrf.mxu0
      %v1701 = vadd.f32 0.0, %v1700
      %1702 = vmatmul.f32.gmra.mxu0 %v1588
      %v1703 = vpop.f32.mrf.mxu0
      %v1704 = vadd.f32 0.0, %v1703
      %1705 = vmatmul.f32.gmra.mxu0 %v1591
      %v1706 = vpop.f32.mrf.mxu0
      %v1707 = vadd.f32 0.0, %v1706
      %1708 = vmatmul.f32.gmra.mxu0 %v1594
      %v1709 = vpop.f32.mrf.mxu0
      %v1710 = vadd.f32 0.0, %v1709
      %1711 = vmatmul.f32.gmra.mxu0 %v1597
      %v1712 = vpop.f32.mrf.mxu0
      %v1713 = vadd.f32 0.0, %v1712
      %1714 = vmatmul.f32.gmra.mxu0 %v1600
      %v1715 = vpop.f32.mrf.mxu0
      %v1716 = vadd.f32 0.0, %v1715
      %1717 = vmatmul.f32.gmra.mxu0 %v1603
      %v1718 = vpop.f32.mrf.mxu0
      %v1719 = vadd.f32 0.0, %v1718
      %1720 = vmatmul.f32.gmra.mxu0 %v1606
      %v1721 = vpop.f32.mrf.mxu0
      %v1722 = vadd.f32 0.0, %v1721
      %1723 = vmatmul.f32.gmra.mxu0 %v1609
      %v1724 = vpop.f32.mrf.mxu0
      %v1725 = vadd.f32 0.0, %v1724
      %1726 = vmatmul.f32.gmra.mxu0 %v1612
      %v1727 = vpop.f32.mrf.mxu0
      %v1728 = vadd.f32 0.0, %v1727
      %1729 = vmatmul.f32.gmra.mxu0 %v1615
      %v1730 = vpop.f32.mrf.mxu0
      %v1731 = vadd.f32 0.0, %v1730
      %1732 = vmatmul.f32.gmra.mxu0 %v1618
      %v1733 = vpop.f32.mrf.mxu0
      %v1734 = vadd.f32 0.0, %v1733
      %1735 = vmatmul.f32.gmra.mxu0 %v1621
      %v1736 = vpop.f32.mrf.mxu0
      %v1737 = vadd.f32 0.0, %v1736
      %1738 = vmatmul.f32.gmra.mxu0 %v1624
      %v1739 = vpop.f32.mrf.mxu0
      %v1740 = vadd.f32 0.0, %v1739
      %1741 = vmatmul.f32.gmra.mxu0 %v1627
      %v1742 = vpop.f32.mrf.mxu0
      %v1743 = vadd.f32 0.0, %v1742
      %1744 = vdwg.mxu0
      %v1745 = vadd.f32 %v1467, %v1650
      %v1746 = vadd.f32 %v1468, %v1653
      %v1747 = vadd.f32 %v1469, %v1656
      %v1748 = vadd.f32 %v1470, %v1659
      %v1749 = vadd.f32 %v1471, %v1662
      %v1750 = vadd.f32 %v1472, %v1665
      %v1751 = vadd.f32 %v1473, %v1668
      %v1752 = vadd.f32 %v1474, %v1671
      %v1753 = vadd.f32 %v1475, %v1674
      %v1754 = vadd.f32 %v1476, %v1677
      %v1755 = vadd.f32 %v1477, %v1680
      %v1756 = vadd.f32 %v1478, %v1683
      %v1757 = vadd.f32 %v1479, %v1686
      %v1758 = vadd.f32 %v1480, %v1689
      %v1759 = vadd.f32 %v1481, %v1692
      %v1760 = vadd.f32 %v1482, %v1695
      %v1761 = vadd.f32 %v1483, %v1698
      %v1762 = vadd.f32 %v1484, %v1701
      %v1763 = vadd.f32 %v1485, %v1704
      %v1764 = vadd.f32 %v1486, %v1707
      %v1765 = vadd.f32 %v1487, %v1710
      %v1766 = vadd.f32 %v1488, %v1713
      %v1767 = vadd.f32 %v1489, %v1716
      %v1768 = vadd.f32 %v1490, %v1719
      %v1769 = vadd.f32 %v1491, %v1722
      %v1770 = vadd.f32 %v1492, %v1725
      %v1771 = vadd.f32 %v1493, %v1728
      %v1772 = vadd.f32 %v1494, %v1731
      %v1773 = vadd.f32 %v1495, %v1734
      %v1774 = vadd.f32 %v1496, %v1737
      %v1775 = vadd.f32 %v1497, %v1740
      %v1776 = vadd.f32 %v1498, %v1743
      %s1777 = scalar_lea.vmem %s165, 48
      %v1778 = vld [vmem:[%s1777] sm:$0xff]
      %v1779 = vld [vmem:[%s1777 + $0x8] sm:$0xff]
      %v1780 = vld [vmem:[%s1777 + $0x18] sm:$0xff]
      %v1781 = vld [vmem:[%s1777 + $0x20] sm:$0xff]
      %v1782 = vld [vmem:[%s1777 + $0x30] sm:$0xff]
      %v1783 = vld [vmem:[%s1777 + $0x38] sm:$0xff]
      %v1784 = vld [vmem:[%s1777 + $0x48] sm:$0xff]
      %v1785 = vld [vmem:[%s1777 + $0x50] sm:$0xff]
      %v1786 = vld [vmem:[%s1777 + $0x60] sm:$0xff]
      %v1787 = vld [vmem:[%s1777 + $0x68] sm:$0xff]
      %v1788 = vld [vmem:[%s1777 + $0x78] sm:$0xff]
      %v1789 = vld [vmem:[%s1777 + $0x80] sm:$0xff]
      %v1790 = vld [vmem:[%s1777 + $0x90] sm:$0xff]
      %v1791 = vld [vmem:[%s1777 + $0x98] sm:$0xff]
      %v1792 = vld [vmem:[%s1777 + $0xa8] sm:$0xff]
      %v1793 = vld [vmem:[%s1777 + $0xb0] sm:$0xff]
      %v1794 = vld [vmem:[%s1777 + $0xc0] sm:$0xff]
      %v1795 = vld [vmem:[%s1777 + $0xc8] sm:$0xff]
      %v1796 = vld [vmem:[%s1777 + $0xd8] sm:$0xff]
      %v1797 = vld [vmem:[%s1777 + $0xe0] sm:$0xff]
      %v1798 = vld [vmem:[%s1777 + $0xf0] sm:$0xff]
      %v1799 = vld [vmem:[%s1777 + $0xf8] sm:$0xff]
      %v1800 = vld [vmem:[%s1777 + $0x108] sm:$0xff]
      %v1801 = vld [vmem:[%s1777 + $0x110] sm:$0xff]
      %v1802 = vld [vmem:[%s1777 + $0x120] sm:$0xff]
      %v1803 = vld [vmem:[%s1777 + $0x128] sm:$0xff]
      %v1804 = vld [vmem:[%s1777 + $0x138] sm:$0xff]
      %v1805 = vld [vmem:[%s1777 + $0x140] sm:$0xff]
      %v1806 = vld [vmem:[%s1777 + $0x150] sm:$0xff]
      %v1807 = vld [vmem:[%s1777 + $0x158] sm:$0xff]
      %v1808 = vld [vmem:[%s1777 + $0x168] sm:$0xff]
      %v1809 = vld [vmem:[%s1777 + $0x170] sm:$0xff]
      %s1810 = scalar_lea.vmem %s1, 24
      %v1811 = vld [vmem:[%s1810] sm:$0xf]
      %v1813 = vsel %vm238, %v1778, 0
      %v1816 = vsel %vm238, %v1779, 0
      %v1819 = vsel %vm238, %v1780, 0
      %v1822 = vsel %vm238, %v1781, 0
      %v1825 = vsel %vm238, %v1782, 0
      %v1828 = vsel %vm238, %v1783, 0
      %v1831 = vsel %vm238, %v1784, 0
      %v1834 = vsel %vm238, %v1785, 0
      %v1837 = vsel %vm238, %v1786, 0
      %v1840 = vsel %vm238, %v1787, 0
      %v1843 = vsel %vm238, %v1788, 0
      %v1846 = vsel %vm238, %v1789, 0
      %v1849 = vsel %vm238, %v1790, 0
      %v1852 = vsel %vm238, %v1791, 0
      %v1855 = vsel %vm238, %v1792, 0
      %v1858 = vsel %vm238, %v1793, 0
      %v1861 = vsel %vm238, %v1794, 0
      %v1864 = vsel %vm238, %v1795, 0
      %v1867 = vsel %vm238, %v1796, 0
      %v1870 = vsel %vm238, %v1797, 0
      %v1873 = vsel %vm238, %v1798, 0
      %v1876 = vsel %vm238, %v1799, 0
      %v1879 = vsel %vm238, %v1800, 0
      %v1882 = vsel %vm238, %v1801, 0
      %v1885 = vsel %vm238, %v1802, 0
      %v1888 = vsel %vm238, %v1803, 0
      %v1891 = vsel %vm238, %v1804, 0
      %v1894 = vsel %vm238, %v1805, 0
      %v1897 = vsel %vm238, %v1806, 0
      %v1900 = vsel %vm238, %v1807, 0
      %v1903 = vsel %vm238, %v1808, 0
      %v1906 = vsel %vm238, %v1809, 0
      %v1909 = vsel %vm335, %v1811, 0
      %1911 = vmatpush.msra.mxu0 0.0
      %1912 = vmatpush.msra.mxu0 0.0
      %1913 = vmatpush.msra.mxu0 0.0
      %1914 = vmatpush.msra.mxu0 0.0
      %1915 = vmatpush.msra.mxu0 0.0
      %1916 = vmatpush.msra.mxu0 0.0
      %1917 = vmatpush.msra.mxu0 0.0
      %1918 = vmatpush.msra.mxu0 0.0
      %1919 = vmatpush.msra.mxu0 0.0
      %1920 = vmatpush.msra.mxu0 0.0
      %1921 = vmatpush.msra.mxu0 0.0
      %1922 = vmatpush.msra.mxu0 0.0
      %1923 = vmatpush.msra.mxu0 0.0
      %1924 = vmatpush.msra.mxu0 0.0
      %1925 = vmatpush.msra.mxu0 0.0
      %1926 = vmatpush.msra.mxu0 %v1909
      %1927 = vmatmul.f32.gmra.mxu0 %v1813
      %v1928 = vpop.f32.mrf.mxu0
      %v1929 = vadd.f32 0.0, %v1928
      %1930 = vmatmul.f32.gmra.mxu0 %v1816
      %v1931 = vpop.f32.mrf.mxu0
      %v1932 = vadd.f32 0.0, %v1931
      %1933 = vmatmul.f32.gmra.mxu0 %v1819
      %v1934 = vpop.f32.mrf.mxu0
      %v1935 = vadd.f32 0.0, %v1934
      %1936 = vmatmul.f32.gmra.mxu0 %v1822
      %v1937 = vpop.f32.mrf.mxu0
      %v1938 = vadd.f32 0.0, %v1937
      %1939 = vmatmul.f32.gmra.mxu0 %v1825
      %v1940 = vpop.f32.mrf.mxu0
      %v1941 = vadd.f32 0.0, %v1940
      %1942 = vmatmul.f32.gmra.mxu0 %v1828
      %v1943 = vpop.f32.mrf.mxu0
      %v1944 = vadd.f32 0.0, %v1943
      %1945 = vmatmul.f32.gmra.mxu0 %v1831
      %v1946 = vpop.f32.mrf.mxu0
      %v1947 = vadd.f32 0.0, %v1946
      %1948 = vmatmul.f32.gmra.mxu0 %v1834
      %v1949 = vpop.f32.mrf.mxu0
      %v1950 = vadd.f32 0.0, %v1949
      %1951 = vmatmul.f32.gmra.mxu0 %v1837
      %v1952 = vpop.f32.mrf.mxu0
      %v1953 = vadd.f32 0.0, %v1952
      %1954 = vmatmul.f32.gmra.mxu0 %v1840
      %v1955 = vpop.f32.mrf.mxu0
      %v1956 = vadd.f32 0.0, %v1955
      %1957 = vmatmul.f32.gmra.mxu0 %v1843
      %v1958 = vpop.f32.mrf.mxu0
      %v1959 = vadd.f32 0.0, %v1958
      %1960 = vmatmul.f32.gmra.mxu0 %v1846
      %v1961 = vpop.f32.mrf.mxu0
      %v1962 = vadd.f32 0.0, %v1961
      %1963 = vmatmul.f32.gmra.mxu0 %v1849
      %v1964 = vpop.f32.mrf.mxu0
      %v1965 = vadd.f32 0.0, %v1964
      %1966 = vmatmul.f32.gmra.mxu0 %v1852
      %v1967 = vpop.f32.mrf.mxu0
      %v1968 = vadd.f32 0.0, %v1967
      %1969 = vmatmul.f32.gmra.mxu0 %v1855
      %v1970 = vpop.f32.mrf.mxu0
      %v1971 = vadd.f32 0.0, %v1970
      %1972 = vmatmul.f32.gmra.mxu0 %v1858
      %v1973 = vpop.f32.mrf.mxu0
      %v1974 = vadd.f32 0.0, %v1973
      %1975 = vmatmul.f32.gmra.mxu0 %v1861
      %v1976 = vpop.f32.mrf.mxu0
      %v1977 = vadd.f32 0.0, %v1976
      %1978 = vmatmul.f32.gmra.mxu0 %v1864
      %v1979 = vpop.f32.mrf.mxu0
      %v1980 = vadd.f32 0.0, %v1979
      %1981 = vmatmul.f32.gmra.mxu0 %v1867
      %v1982 = vpop.f32.mrf.mxu0
      %v1983 = vadd.f32 0.0, %v1982
      %1984 = vmatmul.f32.gmra.mxu0 %v1870
      %v1985 = vpop.f32.mrf.mxu0
      %v1986 = vadd.f32 0.0, %v1985
      %1987 = vmatmul.f32.gmra.mxu0 %v1873
      %v1988 = vpop.f32.mrf.mxu0
      %v1989 = vadd.f32 0.0, %v1988
      %1990 = vmatmul.f32.gmra.mxu0 %v1876
      %v1991 = vpop.f32.mrf.mxu0
      %v1992 = vadd.f32 0.0, %v1991
      %1993 = vmatmul.f32.gmra.mxu0 %v1879
      %v1994 = vpop.f32.mrf.mxu0
      %v1995 = vadd.f32 0.0, %v1994
      %1996 = vmatmul.f32.gmra.mxu0 %v1882
      %v1997 = vpop.f32.mrf.mxu0
      %v1998 = vadd.f32 0.0, %v1997
      %1999 = vmatmul.f32.gmra.mxu0 %v1885
      %v2000 = vpop.f32.mrf.mxu0
      %v2001 = vadd.f32 0.0, %v2000
      %2002 = vmatmul.f32.gmra.mxu0 %v1888
      %v2003 = vpop.f32.mrf.mxu0
      %v2004 = vadd.f32 0.0, %v2003
      %2005 = vmatmul.f32.gmra.mxu0 %v1891
      %v2006 = vpop.f32.mrf.mxu0
      %v2007 = vadd.f32 0.0, %v2006
      %2008 = vmatmul.f32.gmra.mxu0 %v1894
      %v2009 = vpop.f32.mrf.mxu0
      %v2010 = vadd.f32 0.0, %v2009
      %2011 = vmatmul.f32.gmra.mxu0 %v1897
      %v2012 = vpop.f32.mrf.mxu0
      %v2013 = vadd.f32 0.0, %v2012
      %2014 = vmatmul.f32.gmra.mxu0 %v1900
      %v2015 = vpop.f32.mrf.mxu0
      %v2016 = vadd.f32 0.0, %v2015
      %2017 = vmatmul.f32.gmra.mxu0 %v1903
      %v2018 = vpop.f32.mrf.mxu0
      %v2019 = vadd.f32 0.0, %v2018
      %2020 = vmatmul.f32.gmra.mxu0 %v1906
      %v2021 = vpop.f32.mrf.mxu0
      %v2022 = vadd.f32 0.0, %v2021
      %2023 = vdwg.mxu0
      %v2024 = vadd.f32 %v1745, %v1929
      %v2025 = vadd.f32 %v1746, %v1932
      %v2026 = vadd.f32 %v1747, %v1935
      %v2027 = vadd.f32 %v1748, %v1938
      %v2028 = vadd.f32 %v1749, %v1941
      %v2029 = vadd.f32 %v1750, %v1944
      %v2030 = vadd.f32 %v1751, %v1947
      %v2031 = vadd.f32 %v1752, %v1950
      %v2032 = vadd.f32 %v1753, %v1953
      %v2033 = vadd.f32 %v1754, %v1956
      %v2034 = vadd.f32 %v1755, %v1959
      %v2035 = vadd.f32 %v1756, %v1962
      %v2036 = vadd.f32 %v1757, %v1965
      %v2037 = vadd.f32 %v1758, %v1968
      %v2038 = vadd.f32 %v1759, %v1971
      %v2039 = vadd.f32 %v1760, %v1974
      %v2040 = vadd.f32 %v1761, %v1977
      %v2041 = vadd.f32 %v1762, %v1980
      %v2042 = vadd.f32 %v1763, %v1983
      %v2043 = vadd.f32 %v1764, %v1986
      %v2044 = vadd.f32 %v1765, %v1989
      %v2045 = vadd.f32 %v1766, %v1992
      %v2046 = vadd.f32 %v1767, %v1995
      %v2047 = vadd.f32 %v1768, %v1998
      %v2048 = vadd.f32 %v1769, %v2001
      %v2049 = vadd.f32 %v1770, %v2004
      %v2050 = vadd.f32 %v1771, %v2007
      %v2051 = vadd.f32 %v1772, %v2010
      %v2052 = vadd.f32 %v1773, %v2013
      %v2053 = vadd.f32 %v1774, %v2016
      %v2054 = vadd.f32 %v1775, %v2019
      %v2055 = vadd.f32 %v1776, %v2022
      %v2056 = vld [vmem:[%s1777 + $0x1] sm:$0xff]
      %v2057 = vld [vmem:[%s1777 + $0x9] sm:$0xff]
      %v2058 = vld [vmem:[%s1777 + $0x19] sm:$0xff]
      %v2059 = vld [vmem:[%s1777 + $0x21] sm:$0xff]
      %v2060 = vld [vmem:[%s1777 + $0x31] sm:$0xff]
      %v2061 = vld [vmem:[%s1777 + $0x39] sm:$0xff]
      %v2062 = vld [vmem:[%s1777 + $0x49] sm:$0xff]
      %v2063 = vld [vmem:[%s1777 + $0x51] sm:$0xff]
      %v2064 = vld [vmem:[%s1777 + $0x61] sm:$0xff]
      %v2065 = vld [vmem:[%s1777 + $0x69] sm:$0xff]
      %v2066 = vld [vmem:[%s1777 + $0x79] sm:$0xff]
      %v2067 = vld [vmem:[%s1777 + $0x81] sm:$0xff]
      %v2068 = vld [vmem:[%s1777 + $0x91] sm:$0xff]
      %v2069 = vld [vmem:[%s1777 + $0x99] sm:$0xff]
      %v2070 = vld [vmem:[%s1777 + $0xa9] sm:$0xff]
      %v2071 = vld [vmem:[%s1777 + $0xb1] sm:$0xff]
      %v2072 = vld [vmem:[%s1777 + $0xc1] sm:$0xff]
      %v2073 = vld [vmem:[%s1777 + $0xc9] sm:$0xff]
      %v2074 = vld [vmem:[%s1777 + $0xd9] sm:$0xff]
      %v2075 = vld [vmem:[%s1777 + $0xe1] sm:$0xff]
      %v2076 = vld [vmem:[%s1777 + $0xf1] sm:$0xff]
      %v2077 = vld [vmem:[%s1777 + $0xf9] sm:$0xff]
      %v2078 = vld [vmem:[%s1777 + $0x109] sm:$0xff]
      %v2079 = vld [vmem:[%s1777 + $0x111] sm:$0xff]
      %v2080 = vld [vmem:[%s1777 + $0x121] sm:$0xff]
      %v2081 = vld [vmem:[%s1777 + $0x129] sm:$0xff]
      %v2082 = vld [vmem:[%s1777 + $0x139] sm:$0xff]
      %v2083 = vld [vmem:[%s1777 + $0x141] sm:$0xff]
      %v2084 = vld [vmem:[%s1777 + $0x151] sm:$0xff]
      %v2085 = vld [vmem:[%s1777 + $0x159] sm:$0xff]
      %v2086 = vld [vmem:[%s1777 + $0x169] sm:$0xff]
      %v2087 = vld [vmem:[%s1777 + $0x171] sm:$0xff]
      %s2088 = scalar_lea.vmem %s1, 28
      %v2089 = vld [vmem:[%s2088] sm:$0xf]
      %v2091 = vsel %vm238, %v2056, 0
      %v2094 = vsel %vm238, %v2057, 0
      %v2097 = vsel %vm238, %v2058, 0
      %v2100 = vsel %vm238, %v2059, 0
      %v2103 = vsel %vm238, %v2060, 0
      %v2106 = vsel %vm238, %v2061, 0
      %v2109 = vsel %vm238, %v2062, 0
      %v2112 = vsel %vm238, %v2063, 0
      %v2115 = vsel %vm238, %v2064, 0
      %v2118 = vsel %vm238, %v2065, 0
      %v2121 = vsel %vm238, %v2066, 0
      %v2124 = vsel %vm238, %v2067, 0
      %v2127 = vsel %vm238, %v2068, 0
      %v2130 = vsel %vm238, %v2069, 0
      %v2133 = vsel %vm238, %v2070, 0
      %v2136 = vsel %vm238, %v2071, 0
      %v2139 = vsel %vm238, %v2072, 0
      %v2142 = vsel %vm238, %v2073, 0
      %v2145 = vsel %vm238, %v2074, 0
      %v2148 = vsel %vm238, %v2075, 0
      %v2151 = vsel %vm238, %v2076, 0
      %v2154 = vsel %vm238, %v2077, 0
      %v2157 = vsel %vm238, %v2078, 0
      %v2160 = vsel %vm238, %v2079, 0
      %v2163 = vsel %vm238, %v2080, 0
      %v2166 = vsel %vm238, %v2081, 0
      %v2169 = vsel %vm238, %v2082, 0
      %v2172 = vsel %vm238, %v2083, 0
      %v2175 = vsel %vm238, %v2084, 0
      %v2178 = vsel %vm238, %v2085, 0
      %v2181 = vsel %vm238, %v2086, 0
      %v2184 = vsel %vm238, %v2087, 0
      %v2187 = vsel %vm335, %v2089, 0
      %2189 = vmatpush.msra.mxu0 0.0
      %2190 = vmatpush.msra.mxu0 0.0
      %2191 = vmatpush.msra.mxu0 0.0
      %2192 = vmatpush.msra.mxu0 0.0
      %2193 = vmatpush.msra.mxu0 0.0
      %2194 = vmatpush.msra.mxu0 0.0
      %2195 = vmatpush.msra.mxu0 0.0
      %2196 = vmatpush.msra.mxu0 0.0
      %2197 = vmatpush.msra.mxu0 0.0
      %2198 = vmatpush.msra.mxu0 0.0
      %2199 = vmatpush.msra.mxu0 0.0
      %2200 = vmatpush.msra.mxu0 0.0
      %2201 = vmatpush.msra.mxu0 0.0
      %2202 = vmatpush.msra.mxu0 0.0
      %2203 = vmatpush.msra.mxu0 0.0
      %2204 = vmatpush.msra.mxu0 %v2187
      %2205 = vmatmul.f32.gmra.mxu0 %v2091
      %v2206 = vpop.f32.mrf.mxu0
      %v2207 = vadd.f32 0.0, %v2206
      %2208 = vmatmul.f32.gmra.mxu0 %v2094
      %v2209 = vpop.f32.mrf.mxu0
      %v2210 = vadd.f32 0.0, %v2209
      %2211 = vmatmul.f32.gmra.mxu0 %v2097
      %v2212 = vpop.f32.mrf.mxu0
      %v2213 = vadd.f32 0.0, %v2212
      %2214 = vmatmul.f32.gmra.mxu0 %v2100
      %v2215 = vpop.f32.mrf.mxu0
      %v2216 = vadd.f32 0.0, %v2215
      %2217 = vmatmul.f32.gmra.mxu0 %v2103
      %v2218 = vpop.f32.mrf.mxu0
      %v2219 = vadd.f32 0.0, %v2218
      %2220 = vmatmul.f32.gmra.mxu0 %v2106
      %v2221 = vpop.f32.mrf.mxu0
      %v2222 = vadd.f32 0.0, %v2221
      %2223 = vmatmul.f32.gmra.mxu0 %v2109
      %v2224 = vpop.f32.mrf.mxu0
      %v2225 = vadd.f32 0.0, %v2224
      %2226 = vmatmul.f32.gmra.mxu0 %v2112
      %v2227 = vpop.f32.mrf.mxu0
      %v2228 = vadd.f32 0.0, %v2227
      %2229 = vmatmul.f32.gmra.mxu0 %v2115
      %v2230 = vpop.f32.mrf.mxu0
      %v2231 = vadd.f32 0.0, %v2230
      %2232 = vmatmul.f32.gmra.mxu0 %v2118
      %v2233 = vpop.f32.mrf.mxu0
      %v2234 = vadd.f32 0.0, %v2233
      %2235 = vmatmul.f32.gmra.mxu0 %v2121
      %v2236 = vpop.f32.mrf.mxu0
      %v2237 = vadd.f32 0.0, %v2236
      %2238 = vmatmul.f32.gmra.mxu0 %v2124
      %v2239 = vpop.f32.mrf.mxu0
      %v2240 = vadd.f32 0.0, %v2239
      %2241 = vmatmul.f32.gmra.mxu0 %v2127
      %v2242 = vpop.f32.mrf.mxu0
      %v2243 = vadd.f32 0.0, %v2242
      %2244 = vmatmul.f32.gmra.mxu0 %v2130
      %v2245 = vpop.f32.mrf.mxu0
      %v2246 = vadd.f32 0.0, %v2245
      %2247 = vmatmul.f32.gmra.mxu0 %v2133
      %v2248 = vpop.f32.mrf.mxu0
      %v2249 = vadd.f32 0.0, %v2248
      %2250 = vmatmul.f32.gmra.mxu0 %v2136
      %v2251 = vpop.f32.mrf.mxu0
      %v2252 = vadd.f32 0.0, %v2251
      %2253 = vmatmul.f32.gmra.mxu0 %v2139
      %v2254 = vpop.f32.mrf.mxu0
      %v2255 = vadd.f32 0.0, %v2254
      %2256 = vmatmul.f32.gmra.mxu0 %v2142
      %v2257 = vpop.f32.mrf.mxu0
      %v2258 = vadd.f32 0.0, %v2257
      %2259 = vmatmul.f32.gmra.mxu0 %v2145
      %v2260 = vpop.f32.mrf.mxu0
      %v2261 = vadd.f32 0.0, %v2260
      %2262 = vmatmul.f32.gmra.mxu0 %v2148
      %v2263 = vpop.f32.mrf.mxu0
      %v2264 = vadd.f32 0.0, %v2263
      %2265 = vmatmul.f32.gmra.mxu0 %v2151
      %v2266 = vpop.f32.mrf.mxu0
      %v2267 = vadd.f32 0.0, %v2266
      %2268 = vmatmul.f32.gmra.mxu0 %v2154
      %v2269 = vpop.f32.mrf.mxu0
      %v2270 = vadd.f32 0.0, %v2269
      %2271 = vmatmul.f32.gmra.mxu0 %v2157
      %v2272 = vpop.f32.mrf.mxu0
      %v2273 = vadd.f32 0.0, %v2272
      %2274 = vmatmul.f32.gmra.mxu0 %v2160
      %v2275 = vpop.f32.mrf.mxu0
      %v2276 = vadd.f32 0.0, %v2275
      %2277 = vmatmul.f32.gmra.mxu0 %v2163
      %v2278 = vpop.f32.mrf.mxu0
      %v2279 = vadd.f32 0.0, %v2278
      %2280 = vmatmul.f32.gmra.mxu0 %v2166
      %v2281 = vpop.f32.mrf.mxu0
      %v2282 = vadd.f32 0.0, %v2281
      %2283 = vmatmul.f32.gmra.mxu0 %v2169
      %v2284 = vpop.f32.mrf.mxu0
      %v2285 = vadd.f32 0.0, %v2284
      %2286 = vmatmul.f32.gmra.mxu0 %v2172
      %v2287 = vpop.f32.mrf.mxu0
      %v2288 = vadd.f32 0.0, %v2287
      %2289 = vmatmul.f32.gmra.mxu0 %v2175
      %v2290 = vpop.f32.mrf.mxu0
      %v2291 = vadd.f32 0.0, %v2290
      %2292 = vmatmul.f32.gmra.mxu0 %v2178
      %v2293 = vpop.f32.mrf.mxu0
      %v2294 = vadd.f32 0.0, %v2293
      %2295 = vmatmul.f32.gmra.mxu0 %v2181
      %v2296 = vpop.f32.mrf.mxu0
      %v2297 = vadd.f32 0.0, %v2296
      %2298 = vmatmul.f32.gmra.mxu0 %v2184
      %v2299 = vpop.f32.mrf.mxu0
      %v2300 = vadd.f32 0.0, %v2299
      %2301 = vdwg.mxu0
      %v2302 = vadd.f32 %v2024, %v2207
      %v2303 = vadd.f32 %v2025, %v2210
      %v2304 = vadd.f32 %v2026, %v2213
      %v2305 = vadd.f32 %v2027, %v2216
      %v2306 = vadd.f32 %v2028, %v2219
      %v2307 = vadd.f32 %v2029, %v2222
      %v2308 = vadd.f32 %v2030, %v2225
      %v2309 = vadd.f32 %v2031, %v2228
      %v2310 = vadd.f32 %v2032, %v2231
      %v2311 = vadd.f32 %v2033, %v2234
      %v2312 = vadd.f32 %v2034, %v2237
      %v2313 = vadd.f32 %v2035, %v2240
      %v2314 = vadd.f32 %v2036, %v2243
      %v2315 = vadd.f32 %v2037, %v2246
      %v2316 = vadd.f32 %v2038, %v2249
      %v2317 = vadd.f32 %v2039, %v2252
      %v2318 = vadd.f32 %v2040, %v2255
      %v2319 = vadd.f32 %v2041, %v2258
      %v2320 = vadd.f32 %v2042, %v2261
      %v2321 = vadd.f32 %v2043, %v2264
      %v2322 = vadd.f32 %v2044, %v2267
      %v2323 = vadd.f32 %v2045, %v2270
      %v2324 = vadd.f32 %v2046, %v2273
      %v2325 = vadd.f32 %v2047, %v2276
      %v2326 = vadd.f32 %v2048, %v2279
      %v2327 = vadd.f32 %v2049, %v2282
      %v2328 = vadd.f32 %v2050, %v2285
      %v2329 = vadd.f32 %v2051, %v2288
      %v2330 = vadd.f32 %v2052, %v2291
      %v2331 = vadd.f32 %v2053, %v2294
      %v2332 = vadd.f32 %v2054, %v2297
      %v2333 = vadd.f32 %v2055, %v2300
      %v2334 = vld [vmem:[%s1777 + $0x2] sm:$0xff]
      %v2335 = vld [vmem:[%s1777 + $0xa] sm:$0xff]
      %v2336 = vld [vmem:[%s1777 + $0x1a] sm:$0xff]
      %v2337 = vld [vmem:[%s1777 + $0x22] sm:$0xff]
      %v2338 = vld [vmem:[%s1777 + $0x32] sm:$0xff]
      %v2339 = vld [vmem:[%s1777 + $0x3a] sm:$0xff]
      %v2340 = vld [vmem:[%s1777 + $0x4a] sm:$0xff]
      %v2341 = vld [vmem:[%s1777 + $0x52] sm:$0xff]
      %v2342 = vld [vmem:[%s1777 + $0x62] sm:$0xff]
      %v2343 = vld [vmem:[%s1777 + $0x6a] sm:$0xff]
      %v2344 = vld [vmem:[%s1777 + $0x7a] sm:$0xff]
      %v2345 = vld [vmem:[%s1777 + $0x82] sm:$0xff]
      %v2346 = vld [vmem:[%s1777 + $0x92] sm:$0xff]
      %v2347 = vld [vmem:[%s1777 + $0x9a] sm:$0xff]
      %v2348 = vld [vmem:[%s1777 + $0xaa] sm:$0xff]
      %v2349 = vld [vmem:[%s1777 + $0xb2] sm:$0xff]
      %v2350 = vld [vmem:[%s1777 + $0xc2] sm:$0xff]
      %v2351 = vld [vmem:[%s1777 + $0xca] sm:$0xff]
      %v2352 = vld [vmem:[%s1777 + $0xda] sm:$0xff]
      %v2353 = vld [vmem:[%s1777 + $0xe2] sm:$0xff]
      %v2354 = vld [vmem:[%s1777 + $0xf2] sm:$0xff]
      %v2355 = vld [vmem:[%s1777 + $0xfa] sm:$0xff]
      %v2356 = vld [vmem:[%s1777 + $0x10a] sm:$0xff]
      %v2357 = vld [vmem:[%s1777 + $0x112] sm:$0xff]
      %v2358 = vld [vmem:[%s1777 + $0x122] sm:$0xff]
      %v2359 = vld [vmem:[%s1777 + $0x12a] sm:$0xff]
      %v2360 = vld [vmem:[%s1777 + $0x13a] sm:$0xff]
      %v2361 = vld [vmem:[%s1777 + $0x142] sm:$0xff]
      %v2362 = vld [vmem:[%s1777 + $0x152] sm:$0xff]
      %v2363 = vld [vmem:[%s1777 + $0x15a] sm:$0xff]
      %v2364 = vld [vmem:[%s1777 + $0x16a] sm:$0xff]
      %v2365 = vld [vmem:[%s1777 + $0x172] sm:$0xff]
      %s2366 = scalar_lea.vmem %s1, 32
      %v2367 = vld [vmem:[%s2366] sm:$0xf]
      %v2369 = vsel %vm238, %v2334, 0
      %v2372 = vsel %vm238, %v2335, 0
      %v2375 = vsel %vm238, %v2336, 0
      %v2378 = vsel %vm238, %v2337, 0
      %v2381 = vsel %vm238, %v2338, 0
      %v2384 = vsel %vm238, %v2339, 0
      %v2387 = vsel %vm238, %v2340, 0
      %v2390 = vsel %vm238, %v2341, 0
      %v2393 = vsel %vm238, %v2342, 0
      %v2396 = vsel %vm238, %v2343, 0
      %v2399 = vsel %vm238, %v2344, 0
      %v2402 = vsel %vm238, %v2345, 0
      %v2405 = vsel %vm238, %v2346, 0
      %v2408 = vsel %vm238, %v2347, 0
      %v2411 = vsel %vm238, %v2348, 0
      %v2414 = vsel %vm238, %v2349, 0
      %v2417 = vsel %vm238, %v2350, 0
      %v2420 = vsel %vm238, %v2351, 0
      %v2423 = vsel %vm238, %v2352, 0
      %v2426 = vsel %vm238, %v2353, 0
      %v2429 = vsel %vm238, %v2354, 0
      %v2432 = vsel %vm238, %v2355, 0
      %v2435 = vsel %vm238, %v2356, 0
      %v2438 = vsel %vm238, %v2357, 0
      %v2441 = vsel %vm238, %v2358, 0
      %v2444 = vsel %vm238, %v2359, 0
      %v2447 = vsel %vm238, %v2360, 0
      %v2450 = vsel %vm238, %v2361, 0
      %v2453 = vsel %vm238, %v2362, 0
      %v2456 = vsel %vm238, %v2363, 0
      %v2459 = vsel %vm238, %v2364, 0
      %v2462 = vsel %vm238, %v2365, 0
      %v2465 = vsel %vm335, %v2367, 0
      %2467 = vmatpush.msra.mxu0 0.0
      %2468 = vmatpush.msra.mxu0 0.0
      %2469 = vmatpush.msra.mxu0 0.0
      %2470 = vmatpush.msra.mxu0 0.0
      %2471 = vmatpush.msra.mxu0 0.0
      %2472 = vmatpush.msra.mxu0 0.0
      %2473 = vmatpush.msra.mxu0 0.0
      %2474 = vmatpush.msra.mxu0 0.0
      %2475 = vmatpush.msra.mxu0 0.0
      %2476 = vmatpush.msra.mxu0 0.0
      %2477 = vmatpush.msra.mxu0 0.0
      %2478 = vmatpush.msra.mxu0 0.0
      %2479 = vmatpush.msra.mxu0 0.0
      %2480 = vmatpush.msra.mxu0 0.0
      %2481 = vmatpush.msra.mxu0 0.0
      %2482 = vmatpush.msra.mxu0 %v2465
      %2483 = vmatmul.f32.gmra.mxu0 %v2369
      %v2484 = vpop.f32.mrf.mxu0
      %v2485 = vadd.f32 0.0, %v2484
      %2486 = vmatmul.f32.gmra.mxu0 %v2372
      %v2487 = vpop.f32.mrf.mxu0
      %v2488 = vadd.f32 0.0, %v2487
      %2489 = vmatmul.f32.gmra.mxu0 %v2375
      %v2490 = vpop.f32.mrf.mxu0
      %v2491 = vadd.f32 0.0, %v2490
      %2492 = vmatmul.f32.gmra.mxu0 %v2378
      %v2493 = vpop.f32.mrf.mxu0
      %v2494 = vadd.f32 0.0, %v2493
      %2495 = vmatmul.f32.gmra.mxu0 %v2381
      %v2496 = vpop.f32.mrf.mxu0
      %v2497 = vadd.f32 0.0, %v2496
      %2498 = vmatmul.f32.gmra.mxu0 %v2384
      %v2499 = vpop.f32.mrf.mxu0
      %v2500 = vadd.f32 0.0, %v2499
      %2501 = vmatmul.f32.gmra.mxu0 %v2387
      %v2502 = vpop.f32.mrf.mxu0
      %v2503 = vadd.f32 0.0, %v2502
      %2504 = vmatmul.f32.gmra.mxu0 %v2390
      %v2505 = vpop.f32.mrf.mxu0
      %v2506 = vadd.f32 0.0, %v2505
      %2507 = vmatmul.f32.gmra.mxu0 %v2393
      %v2508 = vpop.f32.mrf.mxu0
      %v2509 = vadd.f32 0.0, %v2508
      %2510 = vmatmul.f32.gmra.mxu0 %v2396
      %v2511 = vpop.f32.mrf.mxu0
      %v2512 = vadd.f32 0.0, %v2511
      %2513 = vmatmul.f32.gmra.mxu0 %v2399
      %v2514 = vpop.f32.mrf.mxu0
      %v2515 = vadd.f32 0.0, %v2514
      %2516 = vmatmul.f32.gmra.mxu0 %v2402
      %v2517 = vpop.f32.mrf.mxu0
      %v2518 = vadd.f32 0.0, %v2517
      %2519 = vmatmul.f32.gmra.mxu0 %v2405
      %v2520 = vpop.f32.mrf.mxu0
      %v2521 = vadd.f32 0.0, %v2520
      %2522 = vmatmul.f32.gmra.mxu0 %v2408
      %v2523 = vpop.f32.mrf.mxu0
      %v2524 = vadd.f32 0.0, %v2523
      %2525 = vmatmul.f32.gmra.mxu0 %v2411
      %v2526 = vpop.f32.mrf.mxu0
      %v2527 = vadd.f32 0.0, %v2526
      %2528 = vmatmul.f32.gmra.mxu0 %v2414
      %v2529 = vpop.f32.mrf.mxu0
      %v2530 = vadd.f32 0.0, %v2529
      %2531 = vmatmul.f32.gmra.mxu0 %v2417
      %v2532 = vpop.f32.mrf.mxu0
      %v2533 = vadd.f32 0.0, %v2532
      %2534 = vmatmul.f32.gmra.mxu0 %v2420
      %v2535 = vpop.f32.mrf.mxu0
      %v2536 = vadd.f32 0.0, %v2535
      %2537 = vmatmul.f32.gmra.mxu0 %v2423
      %v2538 = vpop.f32.mrf.mxu0
      %v2539 = vadd.f32 0.0, %v2538
      %2540 = vmatmul.f32.gmra.mxu0 %v2426
      %v2541 = vpop.f32.mrf.mxu0
      %v2542 = vadd.f32 0.0, %v2541
      %2543 = vmatmul.f32.gmra.mxu0 %v2429
      %v2544 = vpop.f32.mrf.mxu0
      %v2545 = vadd.f32 0.0, %v2544
      %2546 = vmatmul.f32.gmra.mxu0 %v2432
      %v2547 = vpop.f32.mrf.mxu0
      %v2548 = vadd.f32 0.0, %v2547
      %2549 = vmatmul.f32.gmra.mxu0 %v2435
      %v2550 = vpop.f32.mrf.mxu0
      %v2551 = vadd.f32 0.0, %v2550
      %2552 = vmatmul.f32.gmra.mxu0 %v2438
      %v2553 = vpop.f32.mrf.mxu0
      %v2554 = vadd.f32 0.0, %v2553
      %2555 = vmatmul.f32.gmra.mxu0 %v2441
      %v2556 = vpop.f32.mrf.mxu0
      %v2557 = vadd.f32 0.0, %v2556
      %2558 = vmatmul.f32.gmra.mxu0 %v2444
      %v2559 = vpop.f32.mrf.mxu0
      %v2560 = vadd.f32 0.0, %v2559
      %2561 = vmatmul.f32.gmra.mxu0 %v2447
      %v2562 = vpop.f32.mrf.mxu0
      %v2563 = vadd.f32 0.0, %v2562
      %2564 = vmatmul.f32.gmra.mxu0 %v2450
      %v2565 = vpop.f32.mrf.mxu0
      %v2566 = vadd.f32 0.0, %v2565
      %2567 = vmatmul.f32.gmra.mxu0 %v2453
      %v2568 = vpop.f32.mrf.mxu0
      %v2569 = vadd.f32 0.0, %v2568
      %2570 = vmatmul.f32.gmra.mxu0 %v2456
      %v2571 = vpop.f32.mrf.mxu0
      %v2572 = vadd.f32 0.0, %v2571
      %2573 = vmatmul.f32.gmra.mxu0 %v2459
      %v2574 = vpop.f32.mrf.mxu0
      %v2575 = vadd.f32 0.0, %v2574
      %2576 = vmatmul.f32.gmra.mxu0 %v2462
      %v2577 = vpop.f32.mrf.mxu0
      %v2578 = vadd.f32 0.0, %v2577
      %2579 = vdwg.mxu0
      %v2580 = vadd.f32 %v2302, %v2485
      %v2581 = vadd.f32 %v2303, %v2488
      %v2582 = vadd.f32 %v2304, %v2491
      %v2583 = vadd.f32 %v2305, %v2494
      %v2584 = vadd.f32 %v2306, %v2497
      %v2585 = vadd.f32 %v2307, %v2500
      %v2586 = vadd.f32 %v2308, %v2503
      %v2587 = vadd.f32 %v2309, %v2506
      %v2588 = vadd.f32 %v2310, %v2509
      %v2589 = vadd.f32 %v2311, %v2512
      %v2590 = vadd.f32 %v2312, %v2515
      %v2591 = vadd.f32 %v2313, %v2518
      %v2592 = vadd.f32 %v2314, %v2521
      %v2593 = vadd.f32 %v2315, %v2524
      %v2594 = vadd.f32 %v2316, %v2527
      %v2595 = vadd.f32 %v2317, %v2530
      %v2596 = vadd.f32 %v2318, %v2533
      %v2597 = vadd.f32 %v2319, %v2536
      %v2598 = vadd.f32 %v2320, %v2539
      %v2599 = vadd.f32 %v2321, %v2542
      %v2600 = vadd.f32 %v2322, %v2545
      %v2601 = vadd.f32 %v2323, %v2548
      %v2602 = vadd.f32 %v2324, %v2551
      %v2603 = vadd.f32 %v2325, %v2554
      %v2604 = vadd.f32 %v2326, %v2557
      %v2605 = vadd.f32 %v2327, %v2560
      %v2606 = vadd.f32 %v2328, %v2563
      %v2607 = vadd.f32 %v2329, %v2566
      %v2608 = vadd.f32 %v2330, %v2569
      %v2609 = vadd.f32 %v2331, %v2572
      %v2610 = vadd.f32 %v2332, %v2575
      %v2611 = vadd.f32 %v2333, %v2578
      %v2612 = vld [vmem:[%s2] sm:$0x1]
      %v2614 = vperm.slane %v2612, 0
      %v2616 = vadd.f32 %v2580, %v2614
      %v2617 = vadd.f32 %v2581, %v2614
      %v2618 = vadd.f32 %v2582, %v2614
      %v2619 = vadd.f32 %v2583, %v2614
      %v2620 = vadd.f32 %v2584, %v2614
      %v2621 = vadd.f32 %v2585, %v2614
      %v2622 = vadd.f32 %v2586, %v2614
      %v2623 = vadd.f32 %v2587, %v2614
      %v2624 = vadd.f32 %v2588, %v2614
      %v2625 = vadd.f32 %v2589, %v2614
      %v2626 = vadd.f32 %v2590, %v2614
      %v2627 = vadd.f32 %v2591, %v2614
      %v2628 = vadd.f32 %v2592, %v2614
      %v2629 = vadd.f32 %v2593, %v2614
      %v2630 = vadd.f32 %v2594, %v2614
      %v2631 = vadd.f32 %v2595, %v2614
      %v2632 = vadd.f32 %v2596, %v2614
      %v2633 = vadd.f32 %v2597, %v2614
      %v2634 = vadd.f32 %v2598, %v2614
      %v2635 = vadd.f32 %v2599, %v2614
      %v2636 = vadd.f32 %v2600, %v2614
      %v2637 = vadd.f32 %v2601, %v2614
      %v2638 = vadd.f32 %v2602, %v2614
      %v2639 = vadd.f32 %v2603, %v2614
      %v2640 = vadd.f32 %v2604, %v2614
      %v2641 = vadd.f32 %v2605, %v2614
      %v2642 = vadd.f32 %v2606, %v2614
      %v2643 = vadd.f32 %v2607, %v2614
      %v2644 = vadd.f32 %v2608, %v2614
      %v2645 = vadd.f32 %v2609, %v2614
      %v2646 = vadd.f32 %v2610, %v2614
      %v2647 = vadd.f32 %v2611, %v2614
      %v2648 = vmax.f32 %v2616, 0.0
      %v2649 = vmax.f32 %v2617, 0.0
      %v2650 = vmax.f32 %v2618, 0.0
      %v2651 = vmax.f32 %v2619, 0.0
      %v2652 = vmax.f32 %v2620, 0.0
      %v2653 = vmax.f32 %v2621, 0.0
      %v2654 = vmax.f32 %v2622, 0.0
      %v2655 = vmax.f32 %v2623, 0.0
      %v2656 = vmax.f32 %v2624, 0.0
      %v2657 = vmax.f32 %v2625, 0.0
      %v2658 = vmax.f32 %v2626, 0.0
      %v2659 = vmax.f32 %v2627, 0.0
      %v2660 = vmax.f32 %v2628, 0.0
      %v2661 = vmax.f32 %v2629, 0.0
      %v2662 = vmax.f32 %v2630, 0.0
      %v2663 = vmax.f32 %v2631, 0.0
      %v2664 = vmax.f32 %v2632, 0.0
      %v2665 = vmax.f32 %v2633, 0.0
      %v2666 = vmax.f32 %v2634, 0.0
      %v2667 = vmax.f32 %v2635, 0.0
      %v2668 = vmax.f32 %v2636, 0.0
      %v2669 = vmax.f32 %v2637, 0.0
      %v2670 = vmax.f32 %v2638, 0.0
      %v2671 = vmax.f32 %v2639, 0.0
      %v2672 = vmax.f32 %v2640, 0.0
      %v2673 = vmax.f32 %v2641, 0.0
      %v2674 = vmax.f32 %v2642, 0.0
      %v2675 = vmax.f32 %v2643, 0.0
      %v2676 = vmax.f32 %v2644, 0.0
      %v2677 = vmax.f32 %v2645, 0.0
      %v2678 = vmax.f32 %v2646, 0.0
      %v2679 = vmax.f32 %v2647, 0.0
      %vm2680 = vcmask 64512
      %2681 = vst.msk [vmem:[%s170] sm:$0xff] %vm2680, %v2648
      %2682 = vst.msk [vmem:[%s170 + $0x8] sm:$0xff] %vm2680, %v2649
      %2683 = vst.msk [vmem:[%s170 + $0x10] sm:$0xff] %vm2680, %v2650
      %2684 = vst.msk [vmem:[%s170 + $0x18] sm:$0xff] %vm2680, %v2651
      %2685 = vst.msk [vmem:[%s170 + $0x20] sm:$0xff] %vm2680, %v2652
      %2686 = vst.msk [vmem:[%s170 + $0x28] sm:$0xff] %vm2680, %v2653
      %2687 = vst.msk [vmem:[%s170 + $0x30] sm:$0xff] %vm2680, %v2654
      %2688 = vst.msk [vmem:[%s170 + $0x38] sm:$0xff] %vm2680, %v2655
      %2689 = vst.msk [vmem:[%s170 + $0x40] sm:$0xff] %vm2680, %v2656
      %2690 = vst.msk [vmem:[%s170 + $0x48] sm:$0xff] %vm2680, %v2657
      %2691 = vst.msk [vmem:[%s170 + $0x50] sm:$0xff] %vm2680, %v2658
      %2692 = vst.msk [vmem:[%s170 + $0x58] sm:$0xff] %vm2680, %v2659
      %2693 = vst.msk [vmem:[%s170 + $0x60] sm:$0xff] %vm2680, %v2660
      %2694 = vst.msk [vmem:[%s170 + $0x68] sm:$0xff] %vm2680, %v2661
      %2695 = vst.msk [vmem:[%s170 + $0x70] sm:$0xff] %vm2680, %v2662
      %2696 = vst.msk [vmem:[%s170 + $0x78] sm:$0xff] %vm2680, %v2663
      %2697 = vst.msk [vmem:[%s170 + $0x80] sm:$0xff] %vm2680, %v2664
      %2698 = vst.msk [vmem:[%s170 + $0x88] sm:$0xff] %vm2680, %v2665
      %2699 = vst.msk [vmem:[%s170 + $0x90] sm:$0xff] %vm2680, %v2666
      %2700 = vst.msk [vmem:[%s170 + $0x98] sm:$0xff] %vm2680, %v2667
      %2701 = vst.msk [vmem:[%s170 + $0xa0] sm:$0xff] %vm2680, %v2668
      %2702 = vst.msk [vmem:[%s170 + $0xa8] sm:$0xff] %vm2680, %v2669
      %2703 = vst.msk [vmem:[%s170 + $0xb0] sm:$0xff] %vm2680, %v2670
      %2704 = vst.msk [vmem:[%s170 + $0xb8] sm:$0xff] %vm2680, %v2671
      %2705 = vst.msk [vmem:[%s170 + $0xc0] sm:$0xff] %vm2680, %v2672
      %2706 = vst.msk [vmem:[%s170 + $0xc8] sm:$0xff] %vm2680, %v2673
      %2707 = vst.msk [vmem:[%s170 + $0xd0] sm:$0xff] %vm2680, %v2674
      %2708 = vst.msk [vmem:[%s170 + $0xd8] sm:$0xff] %vm2680, %v2675
      %2709 = vst.msk [vmem:[%s170 + $0xe0] sm:$0xff] %vm2680, %v2676
      %2710 = vst.msk [vmem:[%s170 + $0xe8] sm:$0xff] %vm2680, %v2677
      %2711 = vst.msk [vmem:[%s170 + $0xf0] sm:$0xff] %vm2680, %v2678
      %2712 = vst.msk [vmem:[%s170 + $0xf8] sm:$0xff] %vm2680, %v2679
      %p2713 = scmp.lt.s32.totalorder %s14, 1
      %s2714 = scalar_select %p2713, %s14, 1
      %s2715 = smul.addr %s2714, 32
      %s2716 = smul.addr %s2715, 8
      %s2717 = scalar_lea.vmem %s3, %s2716
      // Predicated region
      $region33: #{conv_bn_relu.1} parent=31 // pred_check
        %p2718 = pneg %p100
      $region34: #{conv_bn_relu.1} parent=31 // pred_check_branch
        %2720 = sbr.rel (%p2718) target = $region36
      $region35: #{conv_bn_relu.1} parent=31 // pred_region
        _
      $region36: #{conv_bn_relu.1} parent=31 // pred_fallthru
        _
    $region32: #{conv_bn_relu.1} parent=5 // pred_fallthru
      _
    %p2721 = scmp.le.s32.totalorder 2, %s9
    // Predicated region
    $region37: #{conv_bn_relu.1} parent=5 // pred_check
      %p2722 = pneg %p2721
    $region38: #{conv_bn_relu.1} parent=5 // pred_check_branch
      %2724 = sbr.rel (%p2722) target = $region40
    $region39: #{conv_bn_relu.1} parent=5 // pred_region
      %s2725 = ssub.s32 %s9, 2
      // Predicated region
      $region41: #{conv_bn_relu.1} parent=39 // pred_check
        %p2726 = pneg %p106
      $region42: #{conv_bn_relu.1} parent=39 // pred_check_branch
        %2728 = sbr.rel (%p2726) target = $region44
      $region43: #{conv_bn_relu.1} parent=39 // pred_region
        %p2729 = scmp.lt.s32.totalorder %s15, 1
        %s2730 = scalar_select %p2729, %s15, 1
        %s2731 = smul.addr %s2730, 32
        %s2732 = smul.addr %s2731, 8
        %s2733 = scalar_lea.vmem %s3, %s2732
      $region44: #{conv_bn_relu.1} parent=39 // pred_fallthru
        _
    $region40: #{conv_bn_relu.1} parent=5 // pred_fallthru
      _
  $region6: #{conv_bn_relu.1} parent=0 // loop_footer
    %s13 = sadd.s32 1, %s9
  $region7: #{conv_bn_relu.1} parent=0 // loop_footer_branch
    %8 = sbr.rel target = $region3
  $region8: #{conv_bn_relu.1} parent=0 // loop_exit
    _

</llo_original>
